<compile_context>
chip_gen: v7x
topology: tpu7x:2x2x1
jax: 0.10.0
libtpu: 0.0.40
codegen_flags: <defaults>
</compile_context>

<pallas_src>
import jax
import jax.numpy as jnp
from jax.experimental import pallas as pl
from jax.experimental.pallas import tpu as pltpu

HIDDEN = 768          # DistilBERT hidden size
NUM_CATEGORIES = 6
H1, H2, NUM_CLASSES = 512, 256, 2
OUT_PAD = 128         # lane-dense padded logits width (wrapper slices [:, :2])


def _classifier_kernel(text_ref,    # (Bp, 768)  bf16  text (CLS) embedding
                       onehot_ref,  # (Bp, 6)    f32   one-hot(category)
                       fused_ref,   # (6, 512)   f32   cat_table @ W1[768:] + b1
                       w1_ref,      # (768, 512) bf16  text half of W1
                       w2_ref,      # (512, 256) bf16
                       b2_ref,      # (1, 256)   f32
                       w3_ref,      # (256, 128) bf16  zero-padded from (256, 2)
                       b3_ref,      # (1, 128)   f32   zero-padded from (1, 2)
                       out_ref):    # (Bp, 128)  f32
    # nn.Embedding(6,768) gather + category half of Linear(1536,512) + b1,
    # all as one tiny one-hot MXU dot against the pre-fused table.
    cat_term = jnp.dot(onehot_ref[...], fused_ref[...],
                       preferred_element_type=jnp.float32)
    # torch.cat([text, cat_emb], 1) @ W1 + b1  ==  text @ W1_text + cat_term
    h = jnp.dot(text_ref[...], w1_ref[...],
                preferred_element_type=jnp.float32) + cat_term
    h = jnp.maximum(h, 0.0)                       # ReLU (Dropout = identity, eval)
    h = jnp.dot(h.astype(jnp.bfloat16), w2_ref[...],
                preferred_element_type=jnp.float32) + b2_ref[...]
    h = jnp.maximum(h, 0.0)
    logits = jnp.dot(h.astype(jnp.bfloat16), w3_ref[...],
                     preferred_element_type=jnp.float32) + b3_ref[...]
    out_ref[...] = logits


def pack_params(cat_table, w1, b1, w2, b2, w3, b3):
    """One-time host-side parameter fold / cast."""
    fused_cat = (cat_table @ w1[HIDDEN:, :] + b1).astype(jnp.float32)  # (6, 512)
    w1_text = w1[:HIDDEN, :].astype(jnp.bfloat16)                       # (768, 512)
    w2_bf = w2.astype(jnp.bfloat16)
    w3_pad = jnp.zeros((H2, OUT_PAD), jnp.float32).at[:, :NUM_CLASSES].set(w3)
    b3_pad = jnp.zeros((1, OUT_PAD), jnp.float32).at[:, :NUM_CLASSES].set(b3)
    return (fused_cat, w1_text, w2_bf, b2.astype(jnp.float32),
            w3_pad.astype(jnp.bfloat16), b3_pad)


def classifier_head(text_embedding, category, packed):
    """Fused category-embedding + concat + MLP classifier as one Pallas call."""
    fused_cat, w1_text, w2, b2, w3_pad, b3_pad = packed
    B = text_embedding.shape[0]
    Bp = ((B + 7) // 8) * 8                      # pad batch to f32 sublane multiple

    text = jnp.zeros((Bp, HIDDEN), jnp.bfloat16)
    text = text.at[:B].set(text_embedding.astype(jnp.bfloat16))
    cat = jnp.clip(category.astype(jnp.int32), 0, NUM_CATEGORIES - 1)
    onehot = jnp.zeros((Bp, NUM_CATEGORIES), jnp.float32)
    onehot = onehot.at[:B].set(jax.nn.one_hot(cat, NUM_CATEGORIES, dtype=jnp.float32))

    full2d = lambda i: (0, 0)
    in_specs = [
        pl.BlockSpec((Bp, HIDDEN), full2d),
        pl.BlockSpec((Bp, NUM_CATEGORIES), full2d),
        pl.BlockSpec((NUM_CATEGORIES, H1), full2d),
        pl.BlockSpec((HIDDEN, H1), full2d),
        pl.BlockSpec((H1, H2), full2d),
        pl.BlockSpec((1, H2), full2d),
        pl.BlockSpec((H2, OUT_PAD), full2d),
        pl.BlockSpec((1, OUT_PAD), full2d),
    ]

    flops = 2 * Bp * (NUM_CATEGORIES * H1 + HIDDEN * H1 + H1 * H2 + H2 * OUT_PAD)
    bytes_accessed = (text.size * 2 + onehot.size * 4 + fused_cat.size * 4
                      + w1_text.size * 2 + w2.size * 2 + b2.size * 4
                      + w3_pad.size * 2 + b3_pad.size * 4 + Bp * OUT_PAD * 4)

    out = pl.pallas_call(
        _classifier_kernel,
        out_shape=jax.ShapeDtypeStruct((Bp, OUT_PAD), jnp.float32),
        grid=(1,),
        in_specs=in_specs,
        out_specs=pl.BlockSpec((Bp, OUT_PAD), full2d),
        compiler_params=pltpu.CompilerParams(dimension_semantics=("arbitrary",)),
        cost_estimate=pl.CostEstimate(flops=flops, transcendentals=0,
                                      bytes_accessed=bytes_accessed),
    )(text, onehot, fused_cat, w1_text, w2, b2, w3_pad, b3_pad)
    return out[:B, :NUM_CLASSES]


def synthetic_text_embedding(input_ids, attention_mask, token_table):
    # TODO(synk): the pretrained DistilBertModel backbone (6-layer transformer with
    # checkpoint weights) has no clean in-script Pallas equivalent; this deterministic
    # plain-JAX stand-in produces the [B, 768] text embedding the kernel consumes.
    emb = token_table[input_ids]                              # (B, S, 768)
    mask = attention_mask.astype(jnp.float32)[..., None]      # (B, S, 1)
    return (emb * mask).sum(axis=1) / jnp.maximum(mask.sum(axis=1), 1.0)


if __name__ == "__main__":
    key = jax.random.PRNGKey(0)
    keys = jax.random.split(key, 8)

    B, S, VOCAB = 2, 8, 64

    # forward(input_ids, attention_mask, category)
    input_ids = jax.random.randint(keys[0], (B, S), 0, VOCAB, dtype=jnp.int32)
    attention_mask = jnp.ones((B, S), dtype=jnp.int32).at[1, 6:].set(0)
    category = jax.random.randint(keys[1], (B,), 0, NUM_CATEGORIES, dtype=jnp.int32)

    # deterministic parameter init (shapes from the module's __init__)
    token_table = 0.02 * jax.random.normal(keys[2], (VOCAB, HIDDEN), jnp.float32)
    cat_table = 0.02 * jax.random.normal(keys[3], (NUM_CATEGORIES, HIDDEN), jnp.float32)

    def linear_init(k, fan_in, fan_out):
        kw, kb = jax.random.split(k)
        bound = 1.0 / float(fan_in) ** 0.5
        w = jax.random.uniform(kw, (fan_in, fan_out), jnp.float32, -bound, bound)
        b = jax.random.uniform(kb, (1, fan_out), jnp.float32, -bound, bound)
        return w, b

    w1, b1 = linear_init(keys[4], 2 * HIDDEN, H1)
    w2, b2 = linear_init(keys[5], H1, H2)
    w3, b3 = linear_init(keys[6], H2, NUM_CLASSES)

    text_embedding = synthetic_text_embedding(input_ids, attention_mask, token_table)

    packed = pack_params(cat_table, w1, b1, w2, b2, w3, b3)
    logits = classifier_head(text_embedding, category, packed)
    logits = jax.block_until_ready(logits)
    assert logits.shape == (B, NUM_CLASSES)

    # Reference 1: mirrors the kernel's bf16 weight storage exactly (tight check).
    def q(x):
        return x.astype(jnp.bfloat16).astype(jnp.float32)

    fused = cat_table @ w1[HIDDEN:] + b1
    h = jnp.maximum(q(text_embedding) @ q(w1[:HIDDEN]) + fused[category], 0.0)
    h = jnp.maximum(q(h) @ q(w2) + b2, 0.0)
    ref_q = q(h) @ q(w3) + b3
    assert jnp.allclose(logits, ref_q, atol=2e-3, rtol=2e-3)

    # Reference 2: original full-f32 module semantics (dropout = identity, eval).
    combined = jnp.concatenate([text_embedding, cat_table[category]], axis=1)
    ref = jnp.maximum(combined @ w1 + b1, 0.0)
    ref = jnp.maximum(ref @ w2 + b2, 0.0)
    ref = ref @ w3 + b3
    assert jnp.allclose(logits, ref, atol=1e-2, rtol=1e-2)

    print("KERNEL_OK")
</pallas_src>

<mosaic_0001>
module attributes {stable_mosaic.version = 11 : i64} {
  func.func @_classifier_kernel(%arg0: i32, %arg1: memref<8x768xbf16, #tpu.memory_space<vmem>>, %arg2: memref<8x6xf32, #tpu.memory_space<vmem>>, %arg3: memref<6x512xf32, #tpu.memory_space<vmem>>, %arg4: memref<768x512xbf16, #tpu.memory_space<vmem>>, %arg5: memref<512x256xbf16, #tpu.memory_space<vmem>>, %arg6: memref<1x256xf32, #tpu.memory_space<vmem>>, %arg7: memref<256x128xbf16, #tpu.memory_space<vmem>>, %arg8: memref<1x128xf32, #tpu.memory_space<vmem>>, %arg9: memref<8x128xf32, #tpu.memory_space<vmem>>) attributes {dimension_semantics = [#tpu.dimension_semantics<arbitrary>], iteration_bounds = array<i64: 1>, scalar_prefetch = 0 : i64, scratch_operands = 0 : i64, tpu.core_type = #tpu.core_type<tc>, window_params = [{pipeline_mode = #tpu.pipeline_mode<synchronous>, transform_indices = @transform_0, window_bounds = array<i64: 8, 768>}, {pipeline_mode = #tpu.pipeline_mode<synchronous>, transform_indices = @transform_1, window_bounds = array<i64: 8, 6>}, {pipeline_mode = #tpu.pipeline_mode<synchronous>, transform_indices = @transform_2, window_bounds = array<i64: 6, 512>}, {pipeline_mode = #tpu.pipeline_mode<synchronous>, transform_indices = @transform_3, window_bounds = array<i64: 768, 512>}, {pipeline_mode = #tpu.pipeline_mode<synchronous>, transform_indices = @transform_4, window_bounds = array<i64: 512, 256>}, {pipeline_mode = #tpu.pipeline_mode<synchronous>, transform_indices = @transform_5, window_bounds = array<i64: 1, 256>}, {pipeline_mode = #tpu.pipeline_mode<synchronous>, transform_indices = @transform_6, window_bounds = array<i64: 256, 128>}, {pipeline_mode = #tpu.pipeline_mode<synchronous>, transform_indices = @transform_7, window_bounds = array<i64: 1, 128>}, {pipeline_mode = #tpu.pipeline_mode<synchronous>, transform_indices = @transform_8, window_bounds = array<i64: 8, 128>}]} {
    %c0 = arith.constant 0 : index
    %c0_0 = arith.constant 0 : index
    %0 = vector.load %arg2[%c0, %c0_0] : memref<8x6xf32, #tpu.memory_space<vmem>>, vector<8x6xf32>
    %c0_1 = arith.constant 0 : index
    %c0_2 = arith.constant 0 : index
    %1 = vector.load %arg3[%c0_1, %c0_2] : memref<6x512xf32, #tpu.memory_space<vmem>>, vector<6x512xf32>
    %cst = arith.constant dense<0.000000e+00> : vector<8x512xf32>
    %2 = tpu.matmul %0, %1, %cst {dimension_numbers = #tpu.dot_dimension_numbers<[1], [0], [0], [1], [0, 0, 1, 1], [], []>} : vector<8x6xf32>, vector<6x512xf32>, vector<8x512xf32> -> vector<8x512xf32>
    %c0_3 = arith.constant 0 : index
    %c0_4 = arith.constant 0 : index
    %3 = vector.load %arg1[%c0_3, %c0_4] : memref<8x768xbf16, #tpu.memory_space<vmem>>, vector<8x768xbf16>
    %c0_5 = arith.constant 0 : index
    %c0_6 = arith.constant 0 : index
    %4 = vector.load %arg4[%c0_5, %c0_6] : memref<768x512xbf16, #tpu.memory_space<vmem>>, vector<768x512xbf16>
    %cst_7 = arith.constant dense<0.000000e+00> : vector<8x512xf32>
    %5 = tpu.matmul %3, %4, %cst_7 {dimension_numbers = #tpu.dot_dimension_numbers<[1], [0], [0], [1], [0, 0, 1, 1], [], []>} : vector<8x768xbf16>, vector<768x512xbf16>, vector<8x512xf32> -> vector<8x512xf32>
    %6 = arith.addf %5, %2 : vector<8x512xf32>
    %cst_8 = arith.constant 0.000000e+00 : f32
    %7 = vector.broadcast %cst_8 : f32 to vector<8x512xf32>
    %8 = arith.maximumf %6, %7 : vector<8x512xf32>
    %9 = arith.truncf %8 : vector<8x512xf32> to vector<8x512xbf16>
    %c0_9 = arith.constant 0 : index
    %c0_10 = arith.constant 0 : index
    %10 = vector.load %arg5[%c0_9, %c0_10] : memref<512x256xbf16, #tpu.memory_space<vmem>>, vector<512x256xbf16>
    %cst_11 = arith.constant dense<0.000000e+00> : vector<8x256xf32>
    %11 = tpu.matmul %9, %10, %cst_11 {dimension_numbers = #tpu.dot_dimension_numbers<[1], [0], [0], [1], [0, 0, 1, 1], [], []>} : vector<8x512xbf16>, vector<512x256xbf16>, vector<8x256xf32> -> vector<8x256xf32>
    %c0_12 = arith.constant 0 : index
    %c0_13 = arith.constant 0 : index
    %12 = vector.load %arg6[%c0_12, %c0_13] : memref<1x256xf32, #tpu.memory_space<vmem>>, vector<1x256xf32>
    %13 = vector.broadcast %12 : vector<1x256xf32> to vector<8x256xf32>
    %14 = arith.addf %11, %13 : vector<8x256xf32>
    %cst_14 = arith.constant 0.000000e+00 : f32
    %15 = vector.broadcast %cst_14 : f32 to vector<8x256xf32>
    %16 = arith.maximumf %14, %15 : vector<8x256xf32>
    %17 = arith.truncf %16 : vector<8x256xf32> to vector<8x256xbf16>
    %c0_15 = arith.constant 0 : index
    %c0_16 = arith.constant 0 : index
    %18 = vector.load %arg7[%c0_15, %c0_16] : memref<256x128xbf16, #tpu.memory_space<vmem>>, vector<256x128xbf16>
    %cst_17 = arith.constant dense<0.000000e+00> : vector<8x128xf32>
    %19 = tpu.matmul %17, %18, %cst_17 {dimension_numbers = #tpu.dot_dimension_numbers<[1], [0], [0], [1], [0, 0, 1, 1], [], []>} : vector<8x256xbf16>, vector<256x128xbf16>, vector<8x128xf32> -> vector<8x128xf32>
    %c0_18 = arith.constant 0 : index
    %c0_19 = arith.constant 0 : index
    %20 = vector.load %arg8[%c0_18, %c0_19] : memref<1x128xf32, #tpu.memory_space<vmem>>, vector<1x128xf32>
    %21 = vector.broadcast %20 : vector<1x128xf32> to vector<8x128xf32>
    %22 = arith.addf %19, %21 : vector<8x128xf32>
    %c0_20 = arith.constant 0 : index
    %c0_21 = arith.constant 0 : index
    %23 = vector.load %arg9[%c0_20, %c0_21] : memref<8x128xf32, #tpu.memory_space<vmem>>, vector<8x128xf32>
    tpu.vector_store %arg9[%c0_20, %c0_21], %22 {strides = array<i32>} : memref<8x128xf32, #tpu.memory_space<vmem>>, vector<8x128xf32>,
    return
  }
  func.func @transform_0(%arg0: i32) -> (i32, i32) {
    %c0_i32 = arith.constant 0 : i32
    %c0_i32_0 = arith.constant 0 : i32
    %c0_i32_1 = arith.constant 0 : i32
    return %c0_i32, %c0_i32_0 : i32, i32
  }
  func.func @transform_1(%arg0: i32) -> (i32, i32) {
    %c0_i32 = arith.constant 0 : i32
    %c0_i32_0 = arith.constant 0 : i32
    %c0_i32_1 = arith.constant 0 : i32
    return %c0_i32, %c0_i32_0 : i32, i32
  }
  func.func @transform_2(%arg0: i32) -> (i32, i32) {
    %c0_i32 = arith.constant 0 : i32
    %c0_i32_0 = arith.constant 0 : i32
    %c0_i32_1 = arith.constant 0 : i32
    return %c0_i32, %c0_i32_0 : i32, i32
  }
  func.func @transform_3(%arg0: i32) -> (i32, i32) {
    %c0_i32 = arith.constant 0 : i32
    %c0_i32_0 = arith.constant 0 : i32
    %c0_i32_1 = arith.constant 0 : i32
    return %c0_i32, %c0_i32_0 : i32, i32
  }
  func.func @transform_4(%arg0: i32) -> (i32, i32) {
    %c0_i32 = arith.constant 0 : i32
    %c0_i32_0 = arith.constant 0 : i32
    %c0_i32_1 = arith.constant 0 : i32
    return %c0_i32, %c0_i32_0 : i32, i32
  }
  func.func @transform_5(%arg0: i32) -> (i32, i32) {
    %c0_i32 = arith.constant 0 : i32
    %c0_i32_0 = arith.constant 0 : i32
    %c0_i32_1 = arith.constant 0 : i32
    return %c0_i32, %c0_i32_0 : i32, i32
  }
  func.func @transform_6(%arg0: i32) -> (i32, i32) {
    %c0_i32 = arith.constant 0 : i32
    %c0_i32_0 = arith.constant 0 : i32
    %c0_i32_1 = arith.constant 0 : i32
    return %c0_i32, %c0_i32_0 : i32, i32
  }
  func.func @transform_7(%arg0: i32) -> (i32, i32) {
    %c0_i32 = arith.constant 0 : i32
    %c0_i32_0 = arith.constant 0 : i32
    %c0_i32_1 = arith.constant 0 : i32
    return %c0_i32, %c0_i32_0 : i32, i32
  }
  func.func @transform_8(%arg0: i32) -> (i32, i32) {
    %c0_i32 = arith.constant 0 : i32
    %c0_i32_0 = arith.constant 0 : i32
    %c0_i32_1 = arith.constant 0 : i32
    return %c0_i32, %c0_i32_0 : i32, i32
  }
}

</mosaic_0001>

<llo_original>
// kernel: tpu_custom_call.1
$region0: #{tpu_custom_call.1}
  #allocation0 [shape = 'u32[]', space=smem, size = 0x4, offset = 0x4, fixed_abs, tag = 'smem constant byte address 0x4 - core index']
  #allocation1 [shape = 'u32[144,128]{1,0:T(1,128)}', space=vmem, size = 0x12000, scoped, tag = 'internal scratch']
  %s0 = inlined_call_operand.hbm [shape: bf16[8,768], index: 0, kind: input, shape index: {}]
  %s1 = inlined_call_operand.hbm [shape: f32[8,6], index: 1, kind: input, shape index: {}]
  %s2 = inlined_call_operand.hbm [shape: f32[6,512], index: 2, kind: input, shape index: {}]
  %s3 = inlined_call_operand.hbm [shape: bf16[768,512], index: 3, kind: input, shape index: {}]
  %s4 = inlined_call_operand.hbm [shape: bf16[512,256], index: 4, kind: input, shape index: {}]
  %s5 = inlined_call_operand.vmem [shape: f32[1,256], index: 5, kind: input, shape index: {}]
  %s6 = inlined_call_operand.hbm [shape: bf16[256,128], index: 6, kind: input, shape index: {}]
  %s7 = inlined_call_operand.vmem [shape: f32[1,128], index: 7, kind: input, shape index: {}]
  %s8 = inlined_call_operand.hbm [shape: f32[8,128], index: 8, kind: output, shape index: {}]
  %s9 = sld [smem:[#allocation0]]
  $region66: #{tpu_custom_call.1} parent=0
    _
  %s11 = ssub.s32 1, %s9
  %s12 = scalar_select 0, %s11, %s9
  $region1: #{tpu_custom_call.1} parent=0
    #allocation2 [shape = 'u8[12288]{0}', space=vmem, size = 0x3000, scoped, tag = 'input window, operand 0, single buffered']
    #allocation3 [shape = 's32[1]{0}', space=sflag, size = 0x4, scoped, tag = 'scoped memory for tpu_custom_call.1']
    #allocation4 [shape = 's32[1]{0}', space=sflag, size = 0x4, scoped, tag = 'scoped memory for tpu_custom_call.1']
    #allocation5 [shape = 'u8[4096]{0}', space=vmem, size = 0x1000, scoped, tag = 'input window, operand 1, single buffered']
    #allocation6 [shape = 's32[1]{0}', space=sflag, size = 0x4, scoped, tag = 'scoped memory for tpu_custom_call.1']
    #allocation7 [shape = 'u8[16384]{0}', space=vmem, size = 0x4000, scoped, tag = 'input window, operand 2, single buffered']
    #allocation8 [shape = 'u8[786432]{0}', space=vmem, size = 0xc0000, scoped, tag = 'input window, operand 3, single buffered']
    #allocation9 [shape = 's32[1]{0}', space=sflag, size = 0x4, scoped, tag = 'scoped memory for tpu_custom_call.1']
    #allocation10 [shape = 'u8[262144]{0}', space=vmem, size = 0x40000, scoped, tag = 'input window, operand 4, single buffered']
    #allocation11 [shape = 'u8[65536]{0}', space=vmem, size = 0x10000, scoped, tag = 'input window, operand 6, single buffered']
    #allocation12 [shape = 's32[1]{0}', space=sflag, size = 0x4, scoped, tag = 'scoped memory for tpu_custom_call.1']
    #allocation13 [shape = 'u8[4096]{0}', space=vmem, size = 0x1000, scoped, tag = 'output window, operand 0, single buffered']
    %13 = vsyncpa [#allocation3], 0
    %14 = vsyncpa [#allocation6], 0
    %15 = vsyncpa [#allocation9], 0
    %16 = vsyncpa [#allocation12], 0
    %17 = vsyncpa [#allocation4], 0
    // Predicated region
    $region2: #{tpu_custom_call.1} parent=1 // pred_check
      _
    $region3: #{tpu_custom_call.1} parent=1 // pred_check_branch
      %19 = sbr.rel (0) target = $region5
    $region4: #{tpu_custom_call.1} parent=1 // pred_region
      %s21 = ssub.s32 384, 384
      %22 = vsyncadd [#allocation3], %s21
      %s24 = sshll.u32 [#allocation2], 4
      %s25 = int_to_ptr.vmem [resolvable:$true] %s24
      %27 = dma.hbm_to_vmem [thread:$0]  %s0, 384, %s25, [#allocation3]
    $region5: #{tpu_custom_call.1} parent=1 // pred_fallthru
      _
    // Predicated region
    $region6: #{tpu_custom_call.1} parent=1 // pred_check
      _
    $region7: #{tpu_custom_call.1} parent=1 // pred_check_branch
      %29 = sbr.rel (0) target = $region9
    $region8: #{tpu_custom_call.1} parent=1 // pred_region
      %s31 = ssub.s32 128, 128
      %32 = vsyncadd [#allocation6], %s31
      %s34 = sshll.u32 [#allocation5], 4
      %s35 = int_to_ptr.vmem [resolvable:$true] %s34
      %37 = dma.hbm_to_vmem [thread:$0]  %s1, 128, %s35, [#allocation6]
    $region9: #{tpu_custom_call.1} parent=1 // pred_fallthru
      _
    // Predicated region
    $region10: #{tpu_custom_call.1} parent=1 // pred_check
      _
    $region11: #{tpu_custom_call.1} parent=1 // pred_check_branch
      %39 = sbr.rel (0) target = $region13
    $region12: #{tpu_custom_call.1} parent=1 // pred_region
      %s41 = ssub.s32 512, 512
      %42 = vsyncadd [#allocation6], %s41
      %s44 = sshll.u32 [#allocation7], 4
      %s45 = int_to_ptr.vmem [resolvable:$true] %s44
      %47 = dma.hbm_to_vmem [thread:$0]  %s2, 512, %s45, [#allocation6]
    $region13: #{tpu_custom_call.1} parent=1 // pred_fallthru
      _
    // Predicated region
    $region14: #{tpu_custom_call.1} parent=1 // pred_check
      _
    $region15: #{tpu_custom_call.1} parent=1 // pred_check_branch
      %49 = sbr.rel (0) target = $region17
    $region16: #{tpu_custom_call.1} parent=1 // pred_region
      %s51 = ssub.s32 24576, 24576
      %52 = vsyncadd [#allocation9], %s51
      %s53 = sshll.u32 [#allocation8], 4
      %s54 = int_to_ptr.vmem [resolvable:$true] %s53
      %59 = dma.hbm_to_vmem [thread:$0]  %s3, 24576, %s54, [#allocation9], 256, 256, 16
    $region17: #{tpu_custom_call.1} parent=1 // pred_fallthru
      _
    // Predicated region
    $region18: #{tpu_custom_call.1} parent=1 // pred_check
      _
    $region19: #{tpu_custom_call.1} parent=1 // pred_check_branch
      %61 = sbr.rel (0) target = $region21
    $region20: #{tpu_custom_call.1} parent=1 // pred_region
      %s63 = ssub.s32 8192, 8192
      %64 = vsyncadd [#allocation9], %s63
      %s65 = sshll.u32 [#allocation10], 4
      %s66 = int_to_ptr.vmem [resolvable:$true] %s65
      %71 = dma.hbm_to_vmem [thread:$0]  %s4, 8192, %s66, [#allocation9], 128, 128, 8
    $region21: #{tpu_custom_call.1} parent=1 // pred_fallthru
      _
    // Predicated region
    $region22: #{tpu_custom_call.1} parent=1 // pred_check
      _
    $region23: #{tpu_custom_call.1} parent=1 // pred_check_branch
      %73 = sbr.rel (0) target = $region25
    $region24: #{tpu_custom_call.1} parent=1 // pred_region
      _
    $region25: #{tpu_custom_call.1} parent=1 // pred_fallthru
      _
    // Predicated region
    $region26: #{tpu_custom_call.1} parent=1 // pred_check
      _
    $region27: #{tpu_custom_call.1} parent=1 // pred_check_branch
      %75 = sbr.rel (0) target = $region29
    $region28: #{tpu_custom_call.1} parent=1 // pred_region
      %s77 = ssub.s32 2048, 2048
      %78 = vsyncadd [#allocation12], %s77
      %s79 = sshll.u32 [#allocation11], 4
      %s80 = int_to_ptr.vmem [resolvable:$true] %s79
      %85 = dma.hbm_to_vmem [thread:$0]  %s6, 2048, %s80, [#allocation12], 64, 64, 4
    $region29: #{tpu_custom_call.1} parent=1 // pred_fallthru
      _
    // Predicated region
    $region30: #{tpu_custom_call.1} parent=1 // pred_check
      _
    $region31: #{tpu_custom_call.1} parent=1 // pred_check_branch
      %87 = sbr.rel (0) target = $region33
    $region32: #{tpu_custom_call.1} parent=1 // pred_region
      _
    $region33: #{tpu_custom_call.1} parent=1 // pred_fallthru
      _
    // Predicated region
    $region34: #{tpu_custom_call.1} parent=1 // pred_check
      _
    $region35: #{tpu_custom_call.1} parent=1 // pred_check_branch
      %89 = sbr.rel (0) target = $region37
    $region36: #{tpu_custom_call.1} parent=1 // pred_region
      %90 = dma.done [#allocation3], 384
    $region37: #{tpu_custom_call.1} parent=1 // pred_fallthru
      _
    // Predicated region
    $region38: #{tpu_custom_call.1} parent=1 // pred_check
      _
    $region39: #{tpu_custom_call.1} parent=1 // pred_check_branch
      %92 = sbr.rel (0) target = $region41
    $region40: #{tpu_custom_call.1} parent=1 // pred_region
      %93 = dma.done [#allocation6], 128
    $region41: #{tpu_custom_call.1} parent=1 // pred_fallthru
      _
    // Predicated region
    $region42: #{tpu_custom_call.1} parent=1 // pred_check
      _
    $region43: #{tpu_custom_call.1} parent=1 // pred_check_branch
      %95 = sbr.rel (0) target = $region45
    $region44: #{tpu_custom_call.1} parent=1 // pred_region
      %96 = dma.done [#allocation6], 512
    $region45: #{tpu_custom_call.1} parent=1 // pred_fallthru
      _
    // Predicated region
    $region46: #{tpu_custom_call.1} parent=1 // pred_check
      _
    $region47: #{tpu_custom_call.1} parent=1 // pred_check_branch
      %98 = sbr.rel (0) target = $region49
    $region48: #{tpu_custom_call.1} parent=1 // pred_region
      %99 = dma.done [#allocation9], 24576
    $region49: #{tpu_custom_call.1} parent=1 // pred_fallthru
      _
    // Predicated region
    $region50: #{tpu_custom_call.1} parent=1 // pred_check
      _
    $region51: #{tpu_custom_call.1} parent=1 // pred_check_branch
      %101 = sbr.rel (0) target = $region53
    $region52: #{tpu_custom_call.1} parent=1 // pred_region
      %102 = dma.done [#allocation9], 8192
    $region53: #{tpu_custom_call.1} parent=1 // pred_fallthru
      _
    // Predicated region
    $region54: #{tpu_custom_call.1} parent=1 // pred_check
      _
    $region55: #{tpu_custom_call.1} parent=1 // pred_check_branch
      %104 = sbr.rel (0) target = $region57
    $region56: #{tpu_custom_call.1} parent=1 // pred_region
      %105 = dma.done [#allocation12], 2048
    $region57: #{tpu_custom_call.1} parent=1 // pred_fallthru
      _
    %v107 = vld [vmem:[#allocation5] sm:$0xff]
    %v108 = vld [vmem:[#allocation7] sm:$0x3f]
    %v109 = vld [vmem:[#allocation7 + $0x8] sm:$0x3f]
    %v110 = vld [vmem:[#allocation7 + $0x10] sm:$0x3f]
    %v111 = vld [vmem:[#allocation7 + $0x18] sm:$0x3f]
    %vm112 = vcmask 48128
    %v114 = vsel %vm112, %v107, 0
    %vm116 = vcmask 1045504
    %v118 = vsel %vm116, %v108, 0
    %v121 = vsel %vm116, %v109, 0
    %v124 = vsel %vm116, %v110, 0
    %v127 = vsel %vm116, %v111, 0
    %129 = vmatprep.subr.mxu0 %v121
    %130 = vmatpush1.msra.mxu0 %v118
    %131 = vmatprep.subr.mxu0 0.0
    %132 = vmatpush1.msra.mxu0 0.0
    %133 = vmatprep.subr.mxu0 0.0
    %134 = vmatpush1.msra.mxu0 0.0
    %135 = vmatprep.subr.mxu0 0.0
    %136 = vmatpush1.msra.mxu0 0.0
    %137 = vmatprep.subr.mxu0 0.0
    %138 = vmatpush1.msra.mxu0 0.0
    %139 = vmatprep.subr.mxu0 0.0
    %140 = vmatpush1.msra.mxu0 0.0
    %141 = vmatprep.subr.mxu0 0.0
    %142 = vmatpush1.msra.mxu0 0.0
    %143 = vmatprep.subr.mxu0 0.0
    %144 = vmatpush1.msra.mxu0 0.0
    %145 = vmatprep.subr.mxu0 0.0
    %146 = vmatpush1.msra.mxu0 0.0
    %147 = vmatprep.subr.mxu0 0.0
    %148 = vmatpush1.msra.mxu0 0.0
    %149 = vmatprep.subr.mxu0 0.0
    %150 = vmatpush1.msra.mxu0 0.0
    %151 = vmatprep.subr.mxu0 0.0
    %152 = vmatpush1.msra.mxu0 0.0
    %153 = vmatprep.subr.mxu0 0.0
    %154 = vmatpush1.msra.mxu0 0.0
    %155 = vmatprep.subr.mxu0 0.0
    %156 = vmatpush1.msra.mxu0 0.0
    %157 = vmatprep.subr.mxu0 0.0
    %158 = vmatpush1.msra.mxu0 0.0
    %159 = vmatprep.subr.mxu0 0.0
    %160 = vmatpush1.msra.mxu0 0.0
    %161 = vmatprep.subr.mxu0 0.0
    %162 = vmatpush1.msra.mxu0 0.0
    %163 = vmatprep.subr.mxu0 0.0
    %164 = vmatpush1.msra.mxu0 0.0
    %165 = vmatprep.subr.mxu0 0.0
    %166 = vmatpush1.msra.mxu0 0.0
    %167 = vmatprep.subr.mxu0 0.0
    %168 = vmatpush1.msra.mxu0 0.0
    %169 = vmatprep.subr.mxu0 0.0
    %170 = vmatpush1.msra.mxu0 0.0
    %171 = vmatprep.subr.mxu0 0.0
    %172 = vmatpush1.msra.mxu0 0.0
    %173 = vmatprep.subr.mxu0 0.0
    %174 = vmatpush1.msra.mxu0 0.0
    %175 = vmatprep.subr.mxu0 0.0
    %176 = vmatpush1.msra.mxu0 0.0
    %177 = vmatprep.subr.mxu0 0.0
    %178 = vmatpush1.msra.mxu0 0.0
    %179 = vmatprep.subr.mxu0 0.0
    %180 = vmatpush1.msra.mxu0 0.0
    %181 = vmatprep.subr.mxu0 0.0
    %182 = vmatpush1.msra.mxu0 0.0
    %183 = vmatprep.subr.mxu0 0.0
    %184 = vmatpush1.msra.mxu0 0.0
    %185 = vmatprep.subr.mxu0 0.0
    %186 = vmatpush1.msra.mxu0 0.0
    %187 = vmatprep.subr.mxu0 0.0
    %188 = vmatpush1.msra.mxu0 0.0
    %189 = vmatprep.subr.mxu0 0.0
    %190 = vmatpush1.msra.mxu0 0.0
    %191 = vmatprep.subr.mxu0 0.0
    %192 = vmatpush1.msra.mxu0 0.0
    %193 = vmatprep.mubr.f32.mxu0 0.0
    %194 = vmatmul.mubr.f32.gmra.mrb[0].mxu0 %v114
    %v195 = vpop.f32.mrb[0].mxu0
    %v196 = vadd.f32 0.0, %v195
    %v197 = vpop.f32.mrb[0].mxu0
    %v198 = vadd.f32 0.0, %v197
    %199 = vdwg.mxu0
    %200 = vmatprep.subr.mxu0 %v127
    %201 = vmatpush1.msra.mxu0 %v124
    %202 = vmatprep.subr.mxu0 0.0
    %203 = vmatpush1.msra.mxu0 0.0
    %204 = vmatprep.subr.mxu0 0.0
    %205 = vmatpush1.msra.mxu0 0.0
    %206 = vmatprep.subr.mxu0 0.0
    %207 = vmatpush1.msra.mxu0 0.0
    %208 = vmatprep.subr.mxu0 0.0
    %209 = vmatpush1.msra.mxu0 0.0
    %210 = vmatprep.subr.mxu0 0.0
    %211 = vmatpush1.msra.mxu0 0.0
    %212 = vmatprep.subr.mxu0 0.0
    %213 = vmatpush1.msra.mxu0 0.0
    %214 = vmatprep.subr.mxu0 0.0
    %215 = vmatpush1.msra.mxu0 0.0
    %216 = vmatprep.subr.mxu0 0.0
    %217 = vmatpush1.msra.mxu0 0.0
    %218 = vmatprep.subr.mxu0 0.0
    %219 = vmatpush1.msra.mxu0 0.0
    %220 = vmatprep.subr.mxu0 0.0
    %221 = vmatpush1.msra.mxu0 0.0
    %222 = vmatprep.subr.mxu0 0.0
    %223 = vmatpush1.msra.mxu0 0.0
    %224 = vmatprep.subr.mxu0 0.0
    %225 = vmatpush1.msra.mxu0 0.0
    %226 = vmatprep.subr.mxu0 0.0
    %227 = vmatpush1.msra.mxu0 0.0
    %228 = vmatprep.subr.mxu0 0.0
    %229 = vmatpush1.msra.mxu0 0.0
    %230 = vmatprep.subr.mxu0 0.0
    %231 = vmatpush1.msra.mxu0 0.0
    %232 = vmatprep.subr.mxu0 0.0
    %233 = vmatpush1.msra.mxu0 0.0
    %234 = vmatprep.subr.mxu0 0.0
    %235 = vmatpush1.msra.mxu0 0.0
    %236 = vmatprep.subr.mxu0 0.0
    %237 = vmatpush1.msra.mxu0 0.0
    %238 = vmatprep.subr.mxu0 0.0
    %239 = vmatpush1.msra.mxu0 0.0
    %240 = vmatprep.subr.mxu0 0.0
    %241 = vmatpush1.msra.mxu0 0.0
    %242 = vmatprep.subr.mxu0 0.0
    %243 = vmatpush1.msra.mxu0 0.0
    %244 = vmatprep.subr.mxu0 0.0
    %245 = vmatpush1.msra.mxu0 0.0
    %246 = vmatprep.subr.mxu0 0.0
    %247 = vmatpush1.msra.mxu0 0.0
    %248 = vmatprep.subr.mxu0 0.0
    %249 = vmatpush1.msra.mxu0 0.0
    %250 = vmatprep.subr.mxu0 0.0
    %251 = vmatpush1.msra.mxu0 0.0
    %252 = vmatprep.subr.mxu0 0.0
    %253 = vmatpush1.msra.mxu0 0.0
    %254 = vmatprep.subr.mxu0 0.0
    %255 = vmatpush1.msra.mxu0 0.0
    %256 = vmatprep.subr.mxu0 0.0
    %257 = vmatpush1.msra.mxu0 0.0
    %258 = vmatprep.subr.mxu0 0.0
    %259 = vmatpush1.msra.mxu0 0.0
    %260 = vmatprep.subr.mxu0 0.0
    %261 = vmatpush1.msra.mxu0 0.0
    %262 = vmatprep.subr.mxu0 0.0
    %263 = vmatpush1.msra.mxu0 0.0
    %264 = vmatprep.mubr.f32.mxu0 0.0
    %265 = vmatmul.mubr.f32.gmra.mrb[0].mxu0 %v114
    %v266 = vpop.f32.mrb[0].mxu0
    %v267 = vadd.f32 0.0, %v266
    %v268 = vpop.f32.mrb[0].mxu0
    %v269 = vadd.f32 0.0, %v268
    %270 = vdwg.mxu0
    %v271 = vld [vmem:[#allocation2] sm:$0xff]
    %v272 = vld [vmem:[#allocation2 + $0x8] sm:$0xff]
    %v273 = vld [vmem:[#allocation2 + $0x10] sm:$0xff]
    %v274 = vld [vmem:[#allocation8] sm:$0xff]
    %v275 = vld [vmem:[#allocation8 + $0x8] sm:$0xff]
    %v276 = vld [vmem:[#allocation8 + $0x10] sm:$0xff]
    %v277 = vld [vmem:[#allocation8 + $0x18] sm:$0xff]
    %v278 = vld [vmem:[#allocation8 + $0x20] sm:$0xff]
    %v279 = vld [vmem:[#allocation8 + $0x28] sm:$0xff]
    %v280 = vld [vmem:[#allocation8 + $0x30] sm:$0xff]
    %v281 = vld [vmem:[#allocation8 + $0x38] sm:$0xff]
    %v282 = vld [vmem:[#allocation8 + $0x40] sm:$0xff]
    %v283 = vld [vmem:[#allocation8 + $0x48] sm:$0xff]
    %v284 = vld [vmem:[#allocation8 + $0x50] sm:$0xff]
    %v285 = vld [vmem:[#allocation8 + $0x58] sm:$0xff]
    %v286 = vld [vmem:[#allocation8 + $0x60] sm:$0xff]
    %v287 = vld [vmem:[#allocation8 + $0x68] sm:$0xff]
    %v288 = vld [vmem:[#allocation8 + $0x70] sm:$0xff]
    %v289 = vld [vmem:[#allocation8 + $0x78] sm:$0xff]
    %v290 = vld [vmem:[#allocation8 + $0x80] sm:$0xff]
    %v291 = vld [vmem:[#allocation8 + $0x88] sm:$0xff]
    %v292 = vld [vmem:[#allocation8 + $0x90] sm:$0xff]
    %v293 = vld [vmem:[#allocation8 + $0x98] sm:$0xff]
    %v294 = vld [vmem:[#allocation8 + $0xa0] sm:$0xff]
    %v295 = vld [vmem:[#allocation8 + $0xa8] sm:$0xff]
    %v296 = vld [vmem:[#allocation8 + $0xb0] sm:$0xff]
    %v297 = vld [vmem:[#allocation8 + $0xb8] sm:$0xff]
    %v298 = vld [vmem:[#allocation8 + $0xc0] sm:$0xff]
    %v299 = vld [vmem:[#allocation8 + $0xc8] sm:$0xff]
    %v300 = vld [vmem:[#allocation8 + $0xd0] sm:$0xff]
    %v301 = vld [vmem:[#allocation8 + $0xd8] sm:$0xff]
    %v302 = vld [vmem:[#allocation8 + $0xe0] sm:$0xff]
    %v303 = vld [vmem:[#allocation8 + $0xe8] sm:$0xff]
    %v304 = vld [vmem:[#allocation8 + $0xf0] sm:$0xff]
    %v305 = vld [vmem:[#allocation8 + $0xf8] sm:$0xff]
    %v306 = vld [vmem:[#allocation8 + $0x100] sm:$0xff]
    %v307 = vld [vmem:[#allocation8 + $0x108] sm:$0xff]
    %v308 = vld [vmem:[#allocation8 + $0x110] sm:$0xff]
    %v309 = vld [vmem:[#allocation8 + $0x118] sm:$0xff]
    %v310 = vld [vmem:[#allocation8 + $0x120] sm:$0xff]
    %v311 = vld [vmem:[#allocation8 + $0x128] sm:$0xff]
    %v312 = vld [vmem:[#allocation8 + $0x130] sm:$0xff]
    %v313 = vld [vmem:[#allocation8 + $0x138] sm:$0xff]
    %v314 = vld [vmem:[#allocation8 + $0x140] sm:$0xff]
    %v315 = vld [vmem:[#allocation8 + $0x148] sm:$0xff]
    %v316 = vld [vmem:[#allocation8 + $0x150] sm:$0xff]
    %v317 = vld [vmem:[#allocation8 + $0x158] sm:$0xff]
    %v318 = vld [vmem:[#allocation8 + $0x160] sm:$0xff]
    %v319 = vld [vmem:[#allocation8 + $0x168] sm:$0xff]
    %v320 = vld [vmem:[#allocation8 + $0x170] sm:$0xff]
    %v321 = vld [vmem:[#allocation8 + $0x178] sm:$0xff]
    %v322 = vld [vmem:[#allocation8 + $0x180] sm:$0xff]
    %v323 = vld [vmem:[#allocation8 + $0x188] sm:$0xff]
    %v324 = vld [vmem:[#allocation8 + $0x190] sm:$0xff]
    %v325 = vld [vmem:[#allocation8 + $0x198] sm:$0xff]
    %v326 = vld [vmem:[#allocation8 + $0x1a0] sm:$0xff]
    %v327 = vld [vmem:[#allocation8 + $0x1a8] sm:$0xff]
    %v328 = vld [vmem:[#allocation8 + $0x1b0] sm:$0xff]
    %v329 = vld [vmem:[#allocation8 + $0x1b8] sm:$0xff]
    %v330 = vld [vmem:[#allocation8 + $0x1c0] sm:$0xff]
    %v331 = vld [vmem:[#allocation8 + $0x1c8] sm:$0xff]
    %v332 = vld [vmem:[#allocation8 + $0x1d0] sm:$0xff]
    %v333 = vld [vmem:[#allocation8 + $0x1d8] sm:$0xff]
    %v334 = vld [vmem:[#allocation8 + $0x1e0] sm:$0xff]
    %v335 = vld [vmem:[#allocation8 + $0x1e8] sm:$0xff]
    %v336 = vld [vmem:[#allocation8 + $0x1f0] sm:$0xff]
    %v337 = vld [vmem:[#allocation8 + $0x1f8] sm:$0xff]
    %v338 = vld [vmem:[#allocation8 + $0x200] sm:$0xff]
    %v339 = vld [vmem:[#allocation8 + $0x208] sm:$0xff]
    %v340 = vld [vmem:[#allocation8 + $0x210] sm:$0xff]
    %v341 = vld [vmem:[#allocation8 + $0x218] sm:$0xff]
    %v342 = vld [vmem:[#allocation8 + $0x220] sm:$0xff]
    %v343 = vld [vmem:[#allocation8 + $0x228] sm:$0xff]
    %v344 = vld [vmem:[#allocation8 + $0x230] sm:$0xff]
    %v345 = vld [vmem:[#allocation8 + $0x238] sm:$0xff]
    %v346 = vld [vmem:[#allocation8 + $0x240] sm:$0xff]
    %v347 = vld [vmem:[#allocation8 + $0x248] sm:$0xff]
    %v348 = vld [vmem:[#allocation8 + $0x250] sm:$0xff]
    %v349 = vld [vmem:[#allocation8 + $0x258] sm:$0xff]
    %v350 = vld [vmem:[#allocation8 + $0x260] sm:$0xff]
    %v351 = vld [vmem:[#allocation8 + $0x268] sm:$0xff]
    %v352 = vld [vmem:[#allocation8 + $0x270] sm:$0xff]
    %v353 = vld [vmem:[#allocation8 + $0x278] sm:$0xff]
    %v354 = vld [vmem:[#allocation8 + $0x280] sm:$0xff]
    %v355 = vld [vmem:[#allocation8 + $0x288] sm:$0xff]
    %v356 = vld [vmem:[#allocation8 + $0x290] sm:$0xff]
    %v357 = vld [vmem:[#allocation8 + $0x298] sm:$0xff]
    %v358 = vld [vmem:[#allocation8 + $0x2a0] sm:$0xff]
    %v359 = vld [vmem:[#allocation8 + $0x2a8] sm:$0xff]
    %v360 = vld [vmem:[#allocation8 + $0x2b0] sm:$0xff]
    %v361 = vld [vmem:[#allocation8 + $0x2b8] sm:$0xff]
    %v362 = vld [vmem:[#allocation8 + $0x2c0] sm:$0xff]
    %v363 = vld [vmem:[#allocation8 + $0x2c8] sm:$0xff]
    %v364 = vld [vmem:[#allocation8 + $0x2d0] sm:$0xff]
    %v365 = vld [vmem:[#allocation8 + $0x2d8] sm:$0xff]
    %v366 = vld [vmem:[#allocation8 + $0x2e0] sm:$0xff]
    %v367 = vld [vmem:[#allocation8 + $0x2e8] sm:$0xff]
    %v368 = vld [vmem:[#allocation8 + $0x2f0] sm:$0xff]
    %v369 = vld [vmem:[#allocation8 + $0x2f8] sm:$0xff]
    %v370 = vld [vmem:[#allocation8 + $0x300] sm:$0xff]
    %v371 = vld [vmem:[#allocation8 + $0x308] sm:$0xff]
    %v372 = vld [vmem:[#allocation8 + $0x310] sm:$0xff]
    %v373 = vld [vmem:[#allocation8 + $0x318] sm:$0xff]
    %v374 = vld [vmem:[#allocation8 + $0x320] sm:$0xff]
    %v375 = vld [vmem:[#allocation8 + $0x328] sm:$0xff]
    %v376 = vld [vmem:[#allocation8 + $0x330] sm:$0xff]
    %v377 = vld [vmem:[#allocation8 + $0x338] sm:$0xff]
    %v378 = vld [vmem:[#allocation8 + $0x340] sm:$0xff]
    %v379 = vld [vmem:[#allocation8 + $0x348] sm:$0xff]
    %v380 = vld [vmem:[#allocation8 + $0x350] sm:$0xff]
    %v381 = vld [vmem:[#allocation8 + $0x358] sm:$0xff]
    %v382 = vld [vmem:[#allocation8 + $0x360] sm:$0xff]
    %v383 = vld [vmem:[#allocation8 + $0x368] sm:$0xff]
    %v384 = vld [vmem:[#allocation8 + $0x370] sm:$0xff]
    %v385 = vld [vmem:[#allocation8 + $0x378] sm:$0xff]
    %v386 = vld [vmem:[#allocation8 + $0x380] sm:$0xff]
    %v387 = vld [vmem:[#allocation8 + $0x388] sm:$0xff]
    %v388 = vld [vmem:[#allocation8 + $0x390] sm:$0xff]
    %v389 = vld [vmem:[#allocation8 + $0x398] sm:$0xff]
    %v390 = vld [vmem:[#allocation8 + $0x3a0] sm:$0xff]
    %v391 = vld [vmem:[#allocation8 + $0x3a8] sm:$0xff]
    %v392 = vld [vmem:[#allocation8 + $0x3b0] sm:$0xff]
    %v393 = vld [vmem:[#allocation8 + $0x3b8] sm:$0xff]
    %v394 = vld [vmem:[#allocation8 + $0x3c0] sm:$0xff]
    %v395 = vld [vmem:[#allocation8 + $0x3c8] sm:$0xff]
    %v396 = vld [vmem:[#allocation8 + $0x3d0] sm:$0xff]
    %v397 = vld [vmem:[#allocation8 + $0x3d8] sm:$0xff]
    %v398 = vld [vmem:[#allocation8 + $0x3e0] sm:$0xff]
    %v399 = vld [vmem:[#allocation8 + $0x3e8] sm:$0xff]
    %v400 = vld [vmem:[#allocation8 + $0x3f0] sm:$0xff]
    %v401 = vld [vmem:[#allocation8 + $0x3f8] sm:$0xff]
    %v402 = vld [vmem:[#allocation8 + $0x400] sm:$0xff]
    %v403 = vld [vmem:[#allocation8 + $0x408] sm:$0xff]
    %v404 = vld [vmem:[#allocation8 + $0x410] sm:$0xff]
    %v405 = vld [vmem:[#allocation8 + $0x418] sm:$0xff]
    %v406 = vld [vmem:[#allocation8 + $0x420] sm:$0xff]
    %v407 = vld [vmem:[#allocation8 + $0x428] sm:$0xff]
    %v408 = vld [vmem:[#allocation8 + $0x430] sm:$0xff]
    %v409 = vld [vmem:[#allocation8 + $0x438] sm:$0xff]
    %v410 = vld [vmem:[#allocation8 + $0x440] sm:$0xff]
    %v411 = vld [vmem:[#allocation8 + $0x448] sm:$0xff]
    %v412 = vld [vmem:[#allocation8 + $0x450] sm:$0xff]
    %v413 = vld [vmem:[#allocation8 + $0x458] sm:$0xff]
    %v414 = vld [vmem:[#allocation8 + $0x460] sm:$0xff]
    %v415 = vld [vmem:[#allocation8 + $0x468] sm:$0xff]
    %v416 = vld [vmem:[#allocation8 + $0x470] sm:$0xff]
    %v417 = vld [vmem:[#allocation8 + $0x478] sm:$0xff]
    %v418 = vld [vmem:[#allocation8 + $0x480] sm:$0xff]
    %v419 = vld [vmem:[#allocation8 + $0x488] sm:$0xff]
    %v420 = vld [vmem:[#allocation8 + $0x490] sm:$0xff]
    %v421 = vld [vmem:[#allocation8 + $0x498] sm:$0xff]
    %v422 = vld [vmem:[#allocation8 + $0x4a0] sm:$0xff]
    %v423 = vld [vmem:[#allocation8 + $0x4a8] sm:$0xff]
    %v424 = vld [vmem:[#allocation8 + $0x4b0] sm:$0xff]
    %v425 = vld [vmem:[#allocation8 + $0x4b8] sm:$0xff]
    %v426 = vld [vmem:[#allocation8 + $0x4c0] sm:$0xff]
    %v427 = vld [vmem:[#allocation8 + $0x4c8] sm:$0xff]
    %v428 = vld [vmem:[#allocation8 + $0x4d0] sm:$0xff]
    %v429 = vld [vmem:[#allocation8 + $0x4d8] sm:$0xff]
    %v430 = vld [vmem:[#allocation8 + $0x4e0] sm:$0xff]
    %v431 = vld [vmem:[#allocation8 + $0x4e8] sm:$0xff]
    %v432 = vld [vmem:[#allocation8 + $0x4f0] sm:$0xff]
    %v433 = vld [vmem:[#allocation8 + $0x4f8] sm:$0xff]
    %v434 = vld [vmem:[#allocation8 + $0x500] sm:$0xff]
    %v435 = vld [vmem:[#allocation8 + $0x508] sm:$0xff]
    %v436 = vld [vmem:[#allocation8 + $0x510] sm:$0xff]
    %v437 = vld [vmem:[#allocation8 + $0x518] sm:$0xff]
    %v438 = vld [vmem:[#allocation8 + $0x520] sm:$0xff]
    %v439 = vld [vmem:[#allocation8 + $0x528] sm:$0xff]
    %v440 = vld [vmem:[#allocation8 + $0x530] sm:$0xff]
    %v441 = vld [vmem:[#allocation8 + $0x538] sm:$0xff]
    %v442 = vld [vmem:[#allocation8 + $0x540] sm:$0xff]
    %v443 = vld [vmem:[#allocation8 + $0x548] sm:$0xff]
    %v444 = vld [vmem:[#allocation8 + $0x550] sm:$0xff]
    %v445 = vld [vmem:[#allocation8 + $0x558] sm:$0xff]
    %v446 = vld [vmem:[#allocation8 + $0x560] sm:$0xff]
    %v447 = vld [vmem:[#allocation8 + $0x568] sm:$0xff]
    %v448 = vld [vmem:[#allocation8 + $0x570] sm:$0xff]
    %v449 = vld [vmem:[#allocation8 + $0x578] sm:$0xff]
    %v450 = vld [vmem:[#allocation8 + $0x580] sm:$0xff]
    %v451 = vld [vmem:[#allocation8 + $0x588] sm:$0xff]
    %v452 = vld [vmem:[#allocation8 + $0x590] sm:$0xff]
    %v453 = vld [vmem:[#allocation8 + $0x598] sm:$0xff]
    %v454 = vld [vmem:[#allocation8 + $0x5a0] sm:$0xff]
    %v455 = vld [vmem:[#allocation8 + $0x5a8] sm:$0xff]
    %v456 = vld [vmem:[#allocation8 + $0x5b0] sm:$0xff]
    %v457 = vld [vmem:[#allocation8 + $0x5b8] sm:$0xff]
    %v458 = vld [vmem:[#allocation8 + $0x5c0] sm:$0xff]
    %v459 = vld [vmem:[#allocation8 + $0x5c8] sm:$0xff]
    %v460 = vld [vmem:[#allocation8 + $0x5d0] sm:$0xff]
    %v461 = vld [vmem:[#allocation8 + $0x5d8] sm:$0xff]
    %v462 = vld [vmem:[#allocation8 + $0x5e0] sm:$0xff]
    %v463 = vld [vmem:[#allocation8 + $0x5e8] sm:$0xff]
    %v464 = vld [vmem:[#allocation8 + $0x5f0] sm:$0xff]
    %v465 = vld [vmem:[#allocation8 + $0x5f8] sm:$0xff]
    %v469 = vunpack.c.l.b16 %v271
    %v470 = vunpack.c.h.b16 %v271
    %v471 = vunpack.c.l.b16 %v272
    %v472 = vunpack.c.h.b16 %v272
    %v473 = vunpack.c.l.b16 %v273
    %v474 = vunpack.c.h.b16 %v273
    %v475 = vpack.c.b16 %v469, %v469
    %v476 = vpack.c.b16 %v470, %v470
    %v477 = vpack.c.b16 %v471, %v471
    %v478 = vpack.c.b16 %v472, %v472
    %v479 = vpack.c.b16 %v473, %v473
    %v480 = vpack.c.b16 %v474, %v474
    %v679 = vunpack.c.l.b16 %v274
    %v680 = vunpack.c.h.b16 %v274
    %v681 = vunpack.c.l.b16 %v275
    %v682 = vunpack.c.h.b16 %v275
    %v683 = vunpack.c.l.b16 %v276
    %v684 = vunpack.c.h.b16 %v276
    %v685 = vunpack.c.l.b16 %v277
    %v686 = vunpack.c.h.b16 %v277
    %v687 = vunpack.c.l.b16 %v278
    %v688 = vunpack.c.h.b16 %v278
    %v689 = vunpack.c.l.b16 %v279
    %v690 = vunpack.c.h.b16 %v279
    %v691 = vunpack.c.l.b16 %v280
    %v692 = vunpack.c.h.b16 %v280
    %v693 = vunpack.c.l.b16 %v281
    %v694 = vunpack.c.h.b16 %v281
    %v695 = vunpack.c.l.b16 %v282
    %v696 = vunpack.c.h.b16 %v282
    %v697 = vunpack.c.l.b16 %v283
    %v698 = vunpack.c.h.b16 %v283
    %v699 = vunpack.c.l.b16 %v284
    %v700 = vunpack.c.h.b16 %v284
    %v701 = vunpack.c.l.b16 %v285
    %v702 = vunpack.c.h.b16 %v285
    %v703 = vunpack.c.l.b16 %v286
    %v704 = vunpack.c.h.b16 %v286
    %v705 = vunpack.c.l.b16 %v287
    %v706 = vunpack.c.h.b16 %v287
    %v707 = vunpack.c.l.b16 %v288
    %v708 = vunpack.c.h.b16 %v288
    %v709 = vunpack.c.l.b16 %v289
    %v710 = vunpack.c.h.b16 %v289
    %v711 = vunpack.c.l.b16 %v290
    %v712 = vunpack.c.h.b16 %v290
    %v713 = vunpack.c.l.b16 %v291
    %v714 = vunpack.c.h.b16 %v291
    %v715 = vunpack.c.l.b16 %v292
    %v716 = vunpack.c.h.b16 %v292
    %v717 = vunpack.c.l.b16 %v293
    %v718 = vunpack.c.h.b16 %v293
    %v719 = vunpack.c.l.b16 %v294
    %v720 = vunpack.c.h.b16 %v294
    %v721 = vunpack.c.l.b16 %v295
    %v722 = vunpack.c.h.b16 %v295
    %v723 = vunpack.c.l.b16 %v296
    %v724 = vunpack.c.h.b16 %v296
    %v725 = vunpack.c.l.b16 %v297
    %v726 = vunpack.c.h.b16 %v297
    %v727 = vunpack.c.l.b16 %v298
    %v728 = vunpack.c.h.b16 %v298
    %v729 = vunpack.c.l.b16 %v299
    %v730 = vunpack.c.h.b16 %v299
    %v731 = vunpack.c.l.b16 %v300
    %v732 = vunpack.c.h.b16 %v300
    %v733 = vunpack.c.l.b16 %v301
    %v734 = vunpack.c.h.b16 %v301
    %v735 = vunpack.c.l.b16 %v302
    %v736 = vunpack.c.h.b16 %v302
    %v737 = vunpack.c.l.b16 %v303
    %v738 = vunpack.c.h.b16 %v303
    %v739 = vunpack.c.l.b16 %v304
    %v740 = vunpack.c.h.b16 %v304
    %v741 = vunpack.c.l.b16 %v305
    %v742 = vunpack.c.h.b16 %v305
    %v743 = vunpack.c.l.b16 %v306
    %v744 = vunpack.c.h.b16 %v306
    %v745 = vunpack.c.l.b16 %v307
    %v746 = vunpack.c.h.b16 %v307
    %v747 = vunpack.c.l.b16 %v308
    %v748 = vunpack.c.h.b16 %v308
    %v749 = vunpack.c.l.b16 %v309
    %v750 = vunpack.c.h.b16 %v309
    %v751 = vunpack.c.l.b16 %v310
    %v752 = vunpack.c.h.b16 %v310
    %v753 = vunpack.c.l.b16 %v311
    %v754 = vunpack.c.h.b16 %v311
    %v755 = vunpack.c.l.b16 %v312
    %v756 = vunpack.c.h.b16 %v312
    %v757 = vunpack.c.l.b16 %v313
    %v758 = vunpack.c.h.b16 %v313
    %v759 = vunpack.c.l.b16 %v314
    %v760 = vunpack.c.h.b16 %v314
    %v761 = vunpack.c.l.b16 %v315
    %v762 = vunpack.c.h.b16 %v315
    %v763 = vunpack.c.l.b16 %v316
    %v764 = vunpack.c.h.b16 %v316
    %v765 = vunpack.c.l.b16 %v317
    %v766 = vunpack.c.h.b16 %v317
    %v767 = vunpack.c.l.b16 %v318
    %v768 = vunpack.c.h.b16 %v318
    %v769 = vunpack.c.l.b16 %v319
    %v770 = vunpack.c.h.b16 %v319
    %v771 = vunpack.c.l.b16 %v320
    %v772 = vunpack.c.h.b16 %v320
    %v773 = vunpack.c.l.b16 %v321
    %v774 = vunpack.c.h.b16 %v321
    %v775 = vunpack.c.l.b16 %v322
    %v776 = vunpack.c.h.b16 %v322
    %v777 = vunpack.c.l.b16 %v323
    %v778 = vunpack.c.h.b16 %v323
    %v779 = vunpack.c.l.b16 %v324
    %v780 = vunpack.c.h.b16 %v324
    %v781 = vunpack.c.l.b16 %v325
    %v782 = vunpack.c.h.b16 %v325
    %v783 = vunpack.c.l.b16 %v326
    %v784 = vunpack.c.h.b16 %v326
    %v785 = vunpack.c.l.b16 %v327
    %v786 = vunpack.c.h.b16 %v327
    %v787 = vunpack.c.l.b16 %v328
    %v788 = vunpack.c.h.b16 %v328
    %v789 = vunpack.c.l.b16 %v329
    %v790 = vunpack.c.h.b16 %v329
    %v791 = vunpack.c.l.b16 %v330
    %v792 = vunpack.c.h.b16 %v330
    %v793 = vunpack.c.l.b16 %v331
    %v794 = vunpack.c.h.b16 %v331
    %v795 = vunpack.c.l.b16 %v332
    %v796 = vunpack.c.h.b16 %v332
    %v797 = vunpack.c.l.b16 %v333
    %v798 = vunpack.c.h.b16 %v333
    %v799 = vunpack.c.l.b16 %v334
    %v800 = vunpack.c.h.b16 %v334
    %v801 = vunpack.c.l.b16 %v335
    %v802 = vunpack.c.h.b16 %v335
    %v803 = vunpack.c.l.b16 %v336
    %v804 = vunpack.c.h.b16 %v336
    %v805 = vunpack.c.l.b16 %v337
    %v806 = vunpack.c.h.b16 %v337
    %v807 = vunpack.c.l.b16 %v338
    %v808 = vunpack.c.h.b16 %v338
    %v809 = vunpack.c.l.b16 %v339
    %v810 = vunpack.c.h.b16 %v339
    %v811 = vunpack.c.l.b16 %v340
    %v812 = vunpack.c.h.b16 %v340
    %v813 = vunpack.c.l.b16 %v341
    %v814 = vunpack.c.h.b16 %v341
    %v815 = vunpack.c.l.b16 %v342
    %v816 = vunpack.c.h.b16 %v342
    %v817 = vunpack.c.l.b16 %v343
    %v818 = vunpack.c.h.b16 %v343
    %v819 = vunpack.c.l.b16 %v344
    %v820 = vunpack.c.h.b16 %v344
    %v821 = vunpack.c.l.b16 %v345
    %v822 = vunpack.c.h.b16 %v345
    %v823 = vunpack.c.l.b16 %v346
    %v824 = vunpack.c.h.b16 %v346
    %v825 = vunpack.c.l.b16 %v347
    %v826 = vunpack.c.h.b16 %v347
    %v827 = vunpack.c.l.b16 %v348
    %v828 = vunpack.c.h.b16 %v348
    %v829 = vunpack.c.l.b16 %v349
    %v830 = vunpack.c.h.b16 %v349
    %v831 = vunpack.c.l.b16 %v350
    %v832 = vunpack.c.h.b16 %v350
    %v833 = vunpack.c.l.b16 %v351
    %v834 = vunpack.c.h.b16 %v351
    %v835 = vunpack.c.l.b16 %v352
    %v836 = vunpack.c.h.b16 %v352
    %v837 = vunpack.c.l.b16 %v353
    %v838 = vunpack.c.h.b16 %v353
    %v839 = vunpack.c.l.b16 %v354
    %v840 = vunpack.c.h.b16 %v354
    %v841 = vunpack.c.l.b16 %v355
    %v842 = vunpack.c.h.b16 %v355
    %v843 = vunpack.c.l.b16 %v356
    %v844 = vunpack.c.h.b16 %v356
    %v845 = vunpack.c.l.b16 %v357
    %v846 = vunpack.c.h.b16 %v357
    %v847 = vunpack.c.l.b16 %v358
    %v848 = vunpack.c.h.b16 %v358
    %v849 = vunpack.c.l.b16 %v359
    %v850 = vunpack.c.h.b16 %v359
    %v851 = vunpack.c.l.b16 %v360
    %v852 = vunpack.c.h.b16 %v360
    %v853 = vunpack.c.l.b16 %v361
    %v854 = vunpack.c.h.b16 %v361
    %v855 = vunpack.c.l.b16 %v362
    %v856 = vunpack.c.h.b16 %v362
    %v857 = vunpack.c.l.b16 %v363
    %v858 = vunpack.c.h.b16 %v363
    %v859 = vunpack.c.l.b16 %v364
    %v860 = vunpack.c.h.b16 %v364
    %v861 = vunpack.c.l.b16 %v365
    %v862 = vunpack.c.h.b16 %v365
    %v863 = vunpack.c.l.b16 %v366
    %v864 = vunpack.c.h.b16 %v366
    %v865 = vunpack.c.l.b16 %v367
    %v866 = vunpack.c.h.b16 %v367
    %v867 = vunpack.c.l.b16 %v368
    %v868 = vunpack.c.h.b16 %v368
    %v869 = vunpack.c.l.b16 %v369
    %v870 = vunpack.c.h.b16 %v369
    %v871 = vunpack.c.l.b16 %v370
    %v872 = vunpack.c.h.b16 %v370
    %v873 = vunpack.c.l.b16 %v371
    %v874 = vunpack.c.h.b16 %v371
    %v875 = vunpack.c.l.b16 %v372
    %v876 = vunpack.c.h.b16 %v372
    %v877 = vunpack.c.l.b16 %v373
    %v878 = vunpack.c.h.b16 %v373
    %v879 = vunpack.c.l.b16 %v374
    %v880 = vunpack.c.h.b16 %v374
    %v881 = vunpack.c.l.b16 %v375
    %v882 = vunpack.c.h.b16 %v375
    %v883 = vunpack.c.l.b16 %v376
    %v884 = vunpack.c.h.b16 %v376
    %v885 = vunpack.c.l.b16 %v377
    %v886 = vunpack.c.h.b16 %v377
    %v887 = vunpack.c.l.b16 %v378
    %v888 = vunpack.c.h.b16 %v378
    %v889 = vunpack.c.l.b16 %v379
    %v890 = vunpack.c.h.b16 %v379
    %v891 = vunpack.c.l.b16 %v380
    %v892 = vunpack.c.h.b16 %v380
    %v893 = vunpack.c.l.b16 %v381
    %v894 = vunpack.c.h.b16 %v381
    %v895 = vunpack.c.l.b16 %v382
    %v896 = vunpack.c.h.b16 %v382
    %v897 = vunpack.c.l.b16 %v383
    %v898 = vunpack.c.h.b16 %v383
    %v899 = vunpack.c.l.b16 %v384
    %v900 = vunpack.c.h.b16 %v384
    %v901 = vunpack.c.l.b16 %v385
    %v902 = vunpack.c.h.b16 %v385
    %v903 = vunpack.c.l.b16 %v386
    %v904 = vunpack.c.h.b16 %v386
    %v905 = vunpack.c.l.b16 %v387
    %v906 = vunpack.c.h.b16 %v387
    %v907 = vunpack.c.l.b16 %v388
    %v908 = vunpack.c.h.b16 %v388
    %v909 = vunpack.c.l.b16 %v389
    %v910 = vunpack.c.h.b16 %v389
    %v911 = vunpack.c.l.b16 %v390
    %v912 = vunpack.c.h.b16 %v390
    %v913 = vunpack.c.l.b16 %v391
    %v914 = vunpack.c.h.b16 %v391
    %v915 = vunpack.c.l.b16 %v392
    %v916 = vunpack.c.h.b16 %v392
    %v917 = vunpack.c.l.b16 %v393
    %v918 = vunpack.c.h.b16 %v393
    %v919 = vunpack.c.l.b16 %v394
    %v920 = vunpack.c.h.b16 %v394
    %v921 = vunpack.c.l.b16 %v395
    %v922 = vunpack.c.h.b16 %v395
    %v923 = vunpack.c.l.b16 %v396
    %v924 = vunpack.c.h.b16 %v396
    %v925 = vunpack.c.l.b16 %v397
    %v926 = vunpack.c.h.b16 %v397
    %v927 = vunpack.c.l.b16 %v398
    %v928 = vunpack.c.h.b16 %v398
    %v929 = vunpack.c.l.b16 %v399
    %v930 = vunpack.c.h.b16 %v399
    %v931 = vunpack.c.l.b16 %v400
    %v932 = vunpack.c.h.b16 %v400
    %v933 = vunpack.c.l.b16 %v401
    %v934 = vunpack.c.h.b16 %v401
    %v935 = vunpack.c.l.b16 %v402
    %v936 = vunpack.c.h.b16 %v402
    %v937 = vunpack.c.l.b16 %v403
    %v938 = vunpack.c.h.b16 %v403
    %v939 = vunpack.c.l.b16 %v404
    %v940 = vunpack.c.h.b16 %v404
    %v941 = vunpack.c.l.b16 %v405
    %v942 = vunpack.c.h.b16 %v405
    %v943 = vunpack.c.l.b16 %v406
    %v944 = vunpack.c.h.b16 %v406
    %v945 = vunpack.c.l.b16 %v407
    %v946 = vunpack.c.h.b16 %v407
    %v947 = vunpack.c.l.b16 %v408
    %v948 = vunpack.c.h.b16 %v408
    %v949 = vunpack.c.l.b16 %v409
    %v950 = vunpack.c.h.b16 %v409
    %v951 = vunpack.c.l.b16 %v410
    %v952 = vunpack.c.h.b16 %v410
    %v953 = vunpack.c.l.b16 %v411
    %v954 = vunpack.c.h.b16 %v411
    %v955 = vunpack.c.l.b16 %v412
    %v956 = vunpack.c.h.b16 %v412
    %v957 = vunpack.c.l.b16 %v413
    %v958 = vunpack.c.h.b16 %v413
    %v959 = vunpack.c.l.b16 %v414
    %v960 = vunpack.c.h.b16 %v414
    %v961 = vunpack.c.l.b16 %v415
    %v962 = vunpack.c.h.b16 %v415
    %v963 = vunpack.c.l.b16 %v416
    %v964 = vunpack.c.h.b16 %v416
    %v965 = vunpack.c.l.b16 %v417
    %v966 = vunpack.c.h.b16 %v417
    %v967 = vunpack.c.l.b16 %v418
    %v968 = vunpack.c.h.b16 %v418
    %v969 = vunpack.c.l.b16 %v419
    %v970 = vunpack.c.h.b16 %v419
    %v971 = vunpack.c.l.b16 %v420
    %v972 = vunpack.c.h.b16 %v420
    %v973 = vunpack.c.l.b16 %v421
    %v974 = vunpack.c.h.b16 %v421
    %v975 = vunpack.c.l.b16 %v422
    %v976 = vunpack.c.h.b16 %v422
    %v977 = vunpack.c.l.b16 %v423
    %v978 = vunpack.c.h.b16 %v423
    %v979 = vunpack.c.l.b16 %v424
    %v980 = vunpack.c.h.b16 %v424
    %v981 = vunpack.c.l.b16 %v425
    %v982 = vunpack.c.h.b16 %v425
    %v983 = vunpack.c.l.b16 %v426
    %v984 = vunpack.c.h.b16 %v426
    %v985 = vunpack.c.l.b16 %v427
    %v986 = vunpack.c.h.b16 %v427
    %v987 = vunpack.c.l.b16 %v428
    %v988 = vunpack.c.h.b16 %v428
    %v989 = vunpack.c.l.b16 %v429
    %v990 = vunpack.c.h.b16 %v429
    %v991 = vunpack.c.l.b16 %v430
    %v992 = vunpack.c.h.b16 %v430
    %v993 = vunpack.c.l.b16 %v431
    %v994 = vunpack.c.h.b16 %v431
    %v995 = vunpack.c.l.b16 %v432
    %v996 = vunpack.c.h.b16 %v432
    %v997 = vunpack.c.l.b16 %v433
    %v998 = vunpack.c.h.b16 %v433
    %v999 = vunpack.c.l.b16 %v434
    %v1000 = vunpack.c.h.b16 %v434
    %v1001 = vunpack.c.l.b16 %v435
    %v1002 = vunpack.c.h.b16 %v435
    %v1003 = vunpack.c.l.b16 %v436
    %v1004 = vunpack.c.h.b16 %v436
    %v1005 = vunpack.c.l.b16 %v437
    %v1006 = vunpack.c.h.b16 %v437
    %v1007 = vunpack.c.l.b16 %v438
    %v1008 = vunpack.c.h.b16 %v438
    %v1009 = vunpack.c.l.b16 %v439
    %v1010 = vunpack.c.h.b16 %v439
    %v1011 = vunpack.c.l.b16 %v440
    %v1012 = vunpack.c.h.b16 %v440
    %v1013 = vunpack.c.l.b16 %v441
    %v1014 = vunpack.c.h.b16 %v441
    %v1015 = vunpack.c.l.b16 %v442
    %v1016 = vunpack.c.h.b16 %v442
    %v1017 = vunpack.c.l.b16 %v443
    %v1018 = vunpack.c.h.b16 %v443
    %v1019 = vunpack.c.l.b16 %v444
    %v1020 = vunpack.c.h.b16 %v444
    %v1021 = vunpack.c.l.b16 %v445
    %v1022 = vunpack.c.h.b16 %v445
    %v1023 = vunpack.c.l.b16 %v446
    %v1024 = vunpack.c.h.b16 %v446
    %v1025 = vunpack.c.l.b16 %v447
    %v1026 = vunpack.c.h.b16 %v447
    %v1027 = vunpack.c.l.b16 %v448
    %v1028 = vunpack.c.h.b16 %v448
    %v1029 = vunpack.c.l.b16 %v449
    %v1030 = vunpack.c.h.b16 %v449
    %v1031 = vunpack.c.l.b16 %v450
    %v1032 = vunpack.c.h.b16 %v450
    %v1033 = vunpack.c.l.b16 %v451
    %v1034 = vunpack.c.h.b16 %v451
    %v1035 = vunpack.c.l.b16 %v452
    %v1036 = vunpack.c.h.b16 %v452
    %v1037 = vunpack.c.l.b16 %v453
    %v1038 = vunpack.c.h.b16 %v453
    %v1039 = vunpack.c.l.b16 %v454
    %v1040 = vunpack.c.h.b16 %v454
    %v1041 = vunpack.c.l.b16 %v455
    %v1042 = vunpack.c.h.b16 %v455
    %v1043 = vunpack.c.l.b16 %v456
    %v1044 = vunpack.c.h.b16 %v456
    %v1045 = vunpack.c.l.b16 %v457
    %v1046 = vunpack.c.h.b16 %v457
    %v1047 = vunpack.c.l.b16 %v458
    %v1048 = vunpack.c.h.b16 %v458
    %v1049 = vunpack.c.l.b16 %v459
    %v1050 = vunpack.c.h.b16 %v459
    %v1051 = vunpack.c.l.b16 %v460
    %v1052 = vunpack.c.h.b16 %v460
    %v1053 = vunpack.c.l.b16 %v461
    %v1054 = vunpack.c.h.b16 %v461
    %v1055 = vunpack.c.l.b16 %v462
    %v1056 = vunpack.c.h.b16 %v462
    %v1057 = vunpack.c.l.b16 %v463
    %v1058 = vunpack.c.h.b16 %v463
    %v1059 = vunpack.c.l.b16 %v464
    %v1060 = vunpack.c.h.b16 %v464
    %v1061 = vunpack.c.l.b16 %v465
    %v1062 = vunpack.c.h.b16 %v465
    %v1063 = vpack.c.b16 %v683, %v679
    %v1064 = vpack.c.b16 %v684, %v680
    %v1065 = vpack.c.b16 %v685, %v681
    %v1066 = vpack.c.b16 %v686, %v682
    %v1067 = vpack.c.b16 %v691, %v687
    %v1068 = vpack.c.b16 %v692, %v688
    %v1069 = vpack.c.b16 %v693, %v689
    %v1070 = vpack.c.b16 %v694, %v690
    %v1071 = vpack.c.b16 %v699, %v695
    %v1072 = vpack.c.b16 %v700, %v696
    %v1073 = vpack.c.b16 %v701, %v697
    %v1074 = vpack.c.b16 %v702, %v698
    %v1075 = vpack.c.b16 %v707, %v703
    %v1076 = vpack.c.b16 %v708, %v704
    %v1077 = vpack.c.b16 %v709, %v705
    %v1078 = vpack.c.b16 %v710, %v706
    %v1079 = vpack.c.b16 %v715, %v711
    %v1080 = vpack.c.b16 %v716, %v712
    %v1081 = vpack.c.b16 %v717, %v713
    %v1082 = vpack.c.b16 %v718, %v714
    %v1083 = vpack.c.b16 %v723, %v719
    %v1084 = vpack.c.b16 %v724, %v720
    %v1085 = vpack.c.b16 %v725, %v721
    %v1086 = vpack.c.b16 %v726, %v722
    %v1087 = vpack.c.b16 %v731, %v727
    %v1088 = vpack.c.b16 %v732, %v728
    %v1089 = vpack.c.b16 %v733, %v729
    %v1090 = vpack.c.b16 %v734, %v730
    %v1091 = vpack.c.b16 %v739, %v735
    %v1092 = vpack.c.b16 %v740, %v736
    %v1093 = vpack.c.b16 %v741, %v737
    %v1094 = vpack.c.b16 %v742, %v738
    %v1095 = vpack.c.b16 %v747, %v743
    %v1096 = vpack.c.b16 %v748, %v744
    %v1097 = vpack.c.b16 %v749, %v745
    %v1098 = vpack.c.b16 %v750, %v746
    %v1099 = vpack.c.b16 %v755, %v751
    %v1100 = vpack.c.b16 %v756, %v752
    %v1101 = vpack.c.b16 %v757, %v753
    %v1102 = vpack.c.b16 %v758, %v754
    %v1103 = vpack.c.b16 %v763, %v759
    %v1104 = vpack.c.b16 %v764, %v760
    %v1105 = vpack.c.b16 %v765, %v761
    %v1106 = vpack.c.b16 %v766, %v762
    %v1107 = vpack.c.b16 %v771, %v767
    %v1108 = vpack.c.b16 %v772, %v768
    %v1109 = vpack.c.b16 %v773, %v769
    %v1110 = vpack.c.b16 %v774, %v770
    %v1111 = vpack.c.b16 %v779, %v775
    %v1112 = vpack.c.b16 %v780, %v776
    %v1113 = vpack.c.b16 %v781, %v777
    %v1114 = vpack.c.b16 %v782, %v778
    %v1115 = vpack.c.b16 %v787, %v783
    %v1116 = vpack.c.b16 %v788, %v784
    %v1117 = vpack.c.b16 %v789, %v785
    %v1118 = vpack.c.b16 %v790, %v786
    %v1119 = vpack.c.b16 %v795, %v791
    %v1120 = vpack.c.b16 %v796, %v792
    %v1121 = vpack.c.b16 %v797, %v793
    %v1122 = vpack.c.b16 %v798, %v794
    %v1123 = vpack.c.b16 %v803, %v799
    %v1124 = vpack.c.b16 %v804, %v800
    %v1125 = vpack.c.b16 %v805, %v801
    %v1126 = vpack.c.b16 %v806, %v802
    %v1127 = vpack.c.b16 %v811, %v807
    %v1128 = vpack.c.b16 %v812, %v808
    %v1129 = vpack.c.b16 %v813, %v809
    %v1130 = vpack.c.b16 %v814, %v810
    %v1131 = vpack.c.b16 %v819, %v815
    %v1132 = vpack.c.b16 %v820, %v816
    %v1133 = vpack.c.b16 %v821, %v817
    %v1134 = vpack.c.b16 %v822, %v818
    %v1135 = vpack.c.b16 %v827, %v823
    %v1136 = vpack.c.b16 %v828, %v824
    %v1137 = vpack.c.b16 %v829, %v825
    %v1138 = vpack.c.b16 %v830, %v826
    %v1139 = vpack.c.b16 %v835, %v831
    %v1140 = vpack.c.b16 %v836, %v832
    %v1141 = vpack.c.b16 %v837, %v833
    %v1142 = vpack.c.b16 %v838, %v834
    %v1143 = vpack.c.b16 %v843, %v839
    %v1144 = vpack.c.b16 %v844, %v840
    %v1145 = vpack.c.b16 %v845, %v841
    %v1146 = vpack.c.b16 %v846, %v842
    %v1147 = vpack.c.b16 %v851, %v847
    %v1148 = vpack.c.b16 %v852, %v848
    %v1149 = vpack.c.b16 %v853, %v849
    %v1150 = vpack.c.b16 %v854, %v850
    %v1151 = vpack.c.b16 %v859, %v855
    %v1152 = vpack.c.b16 %v860, %v856
    %v1153 = vpack.c.b16 %v861, %v857
    %v1154 = vpack.c.b16 %v862, %v858
    %v1155 = vpack.c.b16 %v867, %v863
    %v1156 = vpack.c.b16 %v868, %v864
    %v1157 = vpack.c.b16 %v869, %v865
    %v1158 = vpack.c.b16 %v870, %v866
    %v1159 = vpack.c.b16 %v875, %v871
    %v1160 = vpack.c.b16 %v876, %v872
    %v1161 = vpack.c.b16 %v877, %v873
    %v1162 = vpack.c.b16 %v878, %v874
    %v1163 = vpack.c.b16 %v883, %v879
    %v1164 = vpack.c.b16 %v884, %v880
    %v1165 = vpack.c.b16 %v885, %v881
    %v1166 = vpack.c.b16 %v886, %v882
    %v1167 = vpack.c.b16 %v891, %v887
    %v1168 = vpack.c.b16 %v892, %v888
    %v1169 = vpack.c.b16 %v893, %v889
    %v1170 = vpack.c.b16 %v894, %v890
    %v1171 = vpack.c.b16 %v899, %v895
    %v1172 = vpack.c.b16 %v900, %v896
    %v1173 = vpack.c.b16 %v901, %v897
    %v1174 = vpack.c.b16 %v902, %v898
    %v1175 = vpack.c.b16 %v907, %v903
    %v1176 = vpack.c.b16 %v908, %v904
    %v1177 = vpack.c.b16 %v909, %v905
    %v1178 = vpack.c.b16 %v910, %v906
    %v1179 = vpack.c.b16 %v915, %v911
    %v1180 = vpack.c.b16 %v916, %v912
    %v1181 = vpack.c.b16 %v917, %v913
    %v1182 = vpack.c.b16 %v918, %v914
    %v1183 = vpack.c.b16 %v923, %v919
    %v1184 = vpack.c.b16 %v924, %v920
    %v1185 = vpack.c.b16 %v925, %v921
    %v1186 = vpack.c.b16 %v926, %v922
    %v1187 = vpack.c.b16 %v931, %v927
    %v1188 = vpack.c.b16 %v932, %v928
    %v1189 = vpack.c.b16 %v933, %v929
    %v1190 = vpack.c.b16 %v934, %v930
    %v1191 = vpack.c.b16 %v939, %v935
    %v1192 = vpack.c.b16 %v940, %v936
    %v1193 = vpack.c.b16 %v941, %v937
    %v1194 = vpack.c.b16 %v942, %v938
    %v1195 = vpack.c.b16 %v947, %v943
    %v1196 = vpack.c.b16 %v948, %v944
    %v1197 = vpack.c.b16 %v949, %v945
    %v1198 = vpack.c.b16 %v950, %v946
    %v1199 = vpack.c.b16 %v955, %v951
    %v1200 = vpack.c.b16 %v956, %v952
    %v1201 = vpack.c.b16 %v957, %v953
    %v1202 = vpack.c.b16 %v958, %v954
    %v1203 = vpack.c.b16 %v963, %v959
    %v1204 = vpack.c.b16 %v964, %v960
    %v1205 = vpack.c.b16 %v965, %v961
    %v1206 = vpack.c.b16 %v966, %v962
    %v1207 = vpack.c.b16 %v971, %v967
    %v1208 = vpack.c.b16 %v972, %v968
    %v1209 = vpack.c.b16 %v973, %v969
    %v1210 = vpack.c.b16 %v974, %v970
    %v1211 = vpack.c.b16 %v979, %v975
    %v1212 = vpack.c.b16 %v980, %v976
    %v1213 = vpack.c.b16 %v981, %v977
    %v1214 = vpack.c.b16 %v982, %v978
    %v1215 = vpack.c.b16 %v987, %v983
    %v1216 = vpack.c.b16 %v988, %v984
    %v1217 = vpack.c.b16 %v989, %v985
    %v1218 = vpack.c.b16 %v990, %v986
    %v1219 = vpack.c.b16 %v995, %v991
    %v1220 = vpack.c.b16 %v996, %v992
    %v1221 = vpack.c.b16 %v997, %v993
    %v1222 = vpack.c.b16 %v998, %v994
    %v1223 = vpack.c.b16 %v1003, %v999
    %v1224 = vpack.c.b16 %v1004, %v1000
    %v1225 = vpack.c.b16 %v1005, %v1001
    %v1226 = vpack.c.b16 %v1006, %v1002
    %v1227 = vpack.c.b16 %v1011, %v1007
    %v1228 = vpack.c.b16 %v1012, %v1008
    %v1229 = vpack.c.b16 %v1013, %v1009
    %v1230 = vpack.c.b16 %v1014, %v1010
    %v1231 = vpack.c.b16 %v1019, %v1015
    %v1232 = vpack.c.b16 %v1020, %v1016
    %v1233 = vpack.c.b16 %v1021, %v1017
    %v1234 = vpack.c.b16 %v1022, %v1018
    %v1235 = vpack.c.b16 %v1027, %v1023
    %v1236 = vpack.c.b16 %v1028, %v1024
    %v1237 = vpack.c.b16 %v1029, %v1025
    %v1238 = vpack.c.b16 %v1030, %v1026
    %v1239 = vpack.c.b16 %v1035, %v1031
    %v1240 = vpack.c.b16 %v1036, %v1032
    %v1241 = vpack.c.b16 %v1037, %v1033
    %v1242 = vpack.c.b16 %v1038, %v1034
    %v1243 = vpack.c.b16 %v1043, %v1039
    %v1244 = vpack.c.b16 %v1044, %v1040
    %v1245 = vpack.c.b16 %v1045, %v1041
    %v1246 = vpack.c.b16 %v1046, %v1042
    %v1247 = vpack.c.b16 %v1051, %v1047
    %v1248 = vpack.c.b16 %v1052, %v1048
    %v1249 = vpack.c.b16 %v1053, %v1049
    %v1250 = vpack.c.b16 %v1054, %v1050
    %v1251 = vpack.c.b16 %v1059, %v1055
    %v1252 = vpack.c.b16 %v1060, %v1056
    %v1253 = vpack.c.b16 %v1061, %v1057
    %v1254 = vpack.c.b16 %v1062, %v1058
    %1447 = vmatprep.subr.bf16.mxu0 %v1064
    %1448 = vmatpush1.bf16.msra.mxu0 %v1063
    %1449 = vmatprep.subr.bf16.mxu0 %v1068
    %1450 = vmatpush1.bf16.msra.mxu0 %v1067
    %1451 = vmatprep.subr.bf16.mxu0 %v1072
    %1452 = vmatpush1.bf16.msra.mxu0 %v1071
    %1453 = vmatprep.subr.bf16.mxu0 %v1076
    %1454 = vmatpush1.bf16.msra.mxu0 %v1075
    %1455 = vmatprep.subr.bf16.mxu0 %v1080
    %1456 = vmatpush1.bf16.msra.mxu0 %v1079
    %1457 = vmatprep.subr.bf16.mxu0 %v1084
    %1458 = vmatpush1.bf16.msra.mxu0 %v1083
    %1459 = vmatprep.subr.bf16.mxu0 %v1088
    %1460 = vmatpush1.bf16.msra.mxu0 %v1087
    %1461 = vmatprep.subr.bf16.mxu0 %v1092
    %1462 = vmatpush1.bf16.msra.mxu0 %v1091
    %1463 = vmatprep.subr.bf16.mxu0 %v1096
    %1464 = vmatpush1.bf16.msra.mxu0 %v1095
    %1465 = vmatprep.subr.bf16.mxu0 %v1100
    %1466 = vmatpush1.bf16.msra.mxu0 %v1099
    %1467 = vmatprep.subr.bf16.mxu0 %v1104
    %1468 = vmatpush1.bf16.msra.mxu0 %v1103
    %1469 = vmatprep.subr.bf16.mxu0 %v1108
    %1470 = vmatpush1.bf16.msra.mxu0 %v1107
    %1471 = vmatprep.subr.bf16.mxu0 %v1112
    %1472 = vmatpush1.bf16.msra.mxu0 %v1111
    %1473 = vmatprep.subr.bf16.mxu0 %v1116
    %1474 = vmatpush1.bf16.msra.mxu0 %v1115
    %1475 = vmatprep.subr.bf16.mxu0 %v1120
    %1476 = vmatpush1.bf16.msra.mxu0 %v1119
    %1477 = vmatprep.subr.bf16.mxu0 %v1124
    %1478 = vmatpush1.bf16.msra.mxu0 %v1123
    %1479 = vmatprep.mubr.bf16.mxu0 %v476
    %1480 = vmatmul.mubr.bf16.gmra.mrb[0].mxu0 %v475
    %v1481 = vpop.f32.mrb[0].mxu0
    %v1482 = vadd.f32 %v196, %v1481
    %v1483 = vpop.f32.mrb[0].mxu0
    %v1484 = vadd.f32 %v198, %v1483
    %v1485 = vpop.f32.mrb[0].mxu0
    %v1486 = vpop.f32.mrb[0].mxu0
    %1487 = vdwg.mxu0
    %1488 = vmatprep.subr.bf16.mxu0 %v1128
    %1489 = vmatpush1.bf16.msra.mxu0 %v1127
    %1490 = vmatprep.subr.bf16.mxu0 %v1132
    %1491 = vmatpush1.bf16.msra.mxu0 %v1131
    %1492 = vmatprep.subr.bf16.mxu0 %v1136
    %1493 = vmatpush1.bf16.msra.mxu0 %v1135
    %1494 = vmatprep.subr.bf16.mxu0 %v1140
    %1495 = vmatpush1.bf16.msra.mxu0 %v1139
    %1496 = vmatprep.subr.bf16.mxu0 %v1144
    %1497 = vmatpush1.bf16.msra.mxu0 %v1143
    %1498 = vmatprep.subr.bf16.mxu0 %v1148
    %1499 = vmatpush1.bf16.msra.mxu0 %v1147
    %1500 = vmatprep.subr.bf16.mxu0 %v1152
    %1501 = vmatpush1.bf16.msra.mxu0 %v1151
    %1502 = vmatprep.subr.bf16.mxu0 %v1156
    %1503 = vmatpush1.bf16.msra.mxu0 %v1155
    %1504 = vmatprep.subr.bf16.mxu0 %v1160
    %1505 = vmatpush1.bf16.msra.mxu0 %v1159
    %1506 = vmatprep.subr.bf16.mxu0 %v1164
    %1507 = vmatpush1.bf16.msra.mxu0 %v1163
    %1508 = vmatprep.subr.bf16.mxu0 %v1168
    %1509 = vmatpush1.bf16.msra.mxu0 %v1167
    %1510 = vmatprep.subr.bf16.mxu0 %v1172
    %1511 = vmatpush1.bf16.msra.mxu0 %v1171
    %1512 = vmatprep.subr.bf16.mxu0 %v1176
    %1513 = vmatpush1.bf16.msra.mxu0 %v1175
    %1514 = vmatprep.subr.bf16.mxu0 %v1180
    %1515 = vmatpush1.bf16.msra.mxu0 %v1179
    %1516 = vmatprep.subr.bf16.mxu0 %v1184
    %1517 = vmatpush1.bf16.msra.mxu0 %v1183
    %1518 = vmatprep.subr.bf16.mxu0 %v1188
    %1519 = vmatpush1.bf16.msra.mxu0 %v1187
    %1520 = vmatprep.mubr.bf16.mxu0 %v478
    %1521 = vmatmul.mubr.bf16.gmra.mrb[0].mxu0 %v477
    %v1522 = vpop.f32.mrb[0].mxu0
    %v1523 = vadd.f32 %v1482, %v1522
    %v1524 = vpop.f32.mrb[0].mxu0
    %v1525 = vadd.f32 %v1484, %v1524
    %v1526 = vpop.f32.mrb[0].mxu0
    %v1527 = vpop.f32.mrb[0].mxu0
    %1528 = vdwg.mxu0
    %1529 = vmatprep.subr.bf16.mxu0 %v1192
    %1530 = vmatpush1.bf16.msra.mxu0 %v1191
    %1531 = vmatprep.subr.bf16.mxu0 %v1196
    %1532 = vmatpush1.bf16.msra.mxu0 %v1195
    %1533 = vmatprep.subr.bf16.mxu0 %v1200
    %1534 = vmatpush1.bf16.msra.mxu0 %v1199
    %1535 = vmatprep.subr.bf16.mxu0 %v1204
    %1536 = vmatpush1.bf16.msra.mxu0 %v1203
    %1537 = vmatprep.subr.bf16.mxu0 %v1208
    %1538 = vmatpush1.bf16.msra.mxu0 %v1207
    %1539 = vmatprep.subr.bf16.mxu0 %v1212
    %1540 = vmatpush1.bf16.msra.mxu0 %v1211
    %1541 = vmatprep.subr.bf16.mxu0 %v1216
    %1542 = vmatpush1.bf16.msra.mxu0 %v1215
    %1543 = vmatprep.subr.bf16.mxu0 %v1220
    %1544 = vmatpush1.bf16.msra.mxu0 %v1219
    %1545 = vmatprep.subr.bf16.mxu0 %v1224
    %1546 = vmatpush1.bf16.msra.mxu0 %v1223
    %1547 = vmatprep.subr.bf16.mxu0 %v1228
    %1548 = vmatpush1.bf16.msra.mxu0 %v1227
    %1549 = vmatprep.subr.bf16.mxu0 %v1232
    %1550 = vmatpush1.bf16.msra.mxu0 %v1231
    %1551 = vmatprep.subr.bf16.mxu0 %v1236
    %1552 = vmatpush1.bf16.msra.mxu0 %v1235
    %1553 = vmatprep.subr.bf16.mxu0 %v1240
    %1554 = vmatpush1.bf16.msra.mxu0 %v1239
    %1555 = vmatprep.subr.bf16.mxu0 %v1244
    %1556 = vmatpush1.bf16.msra.mxu0 %v1243
    %1557 = vmatprep.subr.bf16.mxu0 %v1248
    %1558 = vmatpush1.bf16.msra.mxu0 %v1247
    %1559 = vmatprep.subr.bf16.mxu0 %v1252
    %1560 = vmatpush1.bf16.msra.mxu0 %v1251
    %1561 = vmatprep.mubr.bf16.mxu0 %v480
    %1562 = vmatmul.mubr.bf16.gmra.mrb[0].mxu0 %v479
    %v1563 = vpop.f32.mrb[0].mxu0
    %v1564 = vadd.f32 %v1523, %v1563
    %v1565 = vpop.f32.mrb[0].mxu0
    %v1566 = vadd.f32 %v1525, %v1565
    %v1567 = vpop.f32.mrb[0].mxu0
    %v1568 = vpop.f32.mrb[0].mxu0
    %1569 = vdwg.mxu0
    %1570 = vmatprep.subr.bf16.mxu0 %v1066
    %1571 = vmatpush1.bf16.msra.mxu0 %v1065
    %1572 = vmatprep.subr.bf16.mxu0 %v1070
    %1573 = vmatpush1.bf16.msra.mxu0 %v1069
    %1574 = vmatprep.subr.bf16.mxu0 %v1074
    %1575 = vmatpush1.bf16.msra.mxu0 %v1073
    %1576 = vmatprep.subr.bf16.mxu0 %v1078
    %1577 = vmatpush1.bf16.msra.mxu0 %v1077
    %1578 = vmatprep.subr.bf16.mxu0 %v1082
    %1579 = vmatpush1.bf16.msra.mxu0 %v1081
    %1580 = vmatprep.subr.bf16.mxu0 %v1086
    %1581 = vmatpush1.bf16.msra.mxu0 %v1085
    %1582 = vmatprep.subr.bf16.mxu0 %v1090
    %1583 = vmatpush1.bf16.msra.mxu0 %v1089
    %1584 = vmatprep.subr.bf16.mxu0 %v1094
    %1585 = vmatpush1.bf16.msra.mxu0 %v1093
    %1586 = vmatprep.subr.bf16.mxu0 %v1098
    %1587 = vmatpush1.bf16.msra.mxu0 %v1097
    %1588 = vmatprep.subr.bf16.mxu0 %v1102
    %1589 = vmatpush1.bf16.msra.mxu0 %v1101
    %1590 = vmatprep.subr.bf16.mxu0 %v1106
    %1591 = vmatpush1.bf16.msra.mxu0 %v1105
    %1592 = vmatprep.subr.bf16.mxu0 %v1110
    %1593 = vmatpush1.bf16.msra.mxu0 %v1109
    %1594 = vmatprep.subr.bf16.mxu0 %v1114
    %1595 = vmatpush1.bf16.msra.mxu0 %v1113
    %1596 = vmatprep.subr.bf16.mxu0 %v1118
    %1597 = vmatpush1.bf16.msra.mxu0 %v1117
    %1598 = vmatprep.subr.bf16.mxu0 %v1122
    %1599 = vmatpush1.bf16.msra.mxu0 %v1121
    %1600 = vmatprep.subr.bf16.mxu0 %v1126
    %1601 = vmatpush1.bf16.msra.mxu0 %v1125
    %1602 = vmatprep.mubr.bf16.mxu0 %v476
    %1603 = vmatmul.mubr.bf16.gmra.mrb[0].mxu0 %v475
    %v1604 = vpop.f32.mrb[0].mxu0
    %v1605 = vadd.f32 %v267, %v1604
    %v1606 = vpop.f32.mrb[0].mxu0
    %v1607 = vadd.f32 %v269, %v1606
    %v1608 = vpop.f32.mrb[0].mxu0
    %v1609 = vpop.f32.mrb[0].mxu0
    %1610 = vdwg.mxu0
    %1611 = vmatprep.subr.bf16.mxu0 %v1130
    %1612 = vmatpush1.bf16.msra.mxu0 %v1129
    %1613 = vmatprep.subr.bf16.mxu0 %v1134
    %1614 = vmatpush1.bf16.msra.mxu0 %v1133
    %1615 = vmatprep.subr.bf16.mxu0 %v1138
    %1616 = vmatpush1.bf16.msra.mxu0 %v1137
    %1617 = vmatprep.subr.bf16.mxu0 %v1142
    %1618 = vmatpush1.bf16.msra.mxu0 %v1141
    %1619 = vmatprep.subr.bf16.mxu0 %v1146
    %1620 = vmatpush1.bf16.msra.mxu0 %v1145
    %1621 = vmatprep.subr.bf16.mxu0 %v1150
    %1622 = vmatpush1.bf16.msra.mxu0 %v1149
    %1623 = vmatprep.subr.bf16.mxu0 %v1154
    %1624 = vmatpush1.bf16.msra.mxu0 %v1153
    %1625 = vmatprep.subr.bf16.mxu0 %v1158
    %1626 = vmatpush1.bf16.msra.mxu0 %v1157
    %1627 = vmatprep.subr.bf16.mxu0 %v1162
    %1628 = vmatpush1.bf16.msra.mxu0 %v1161
    %1629 = vmatprep.subr.bf16.mxu0 %v1166
    %1630 = vmatpush1.bf16.msra.mxu0 %v1165
    %1631 = vmatprep.subr.bf16.mxu0 %v1170
    %1632 = vmatpush1.bf16.msra.mxu0 %v1169
    %1633 = vmatprep.subr.bf16.mxu0 %v1174
    %1634 = vmatpush1.bf16.msra.mxu0 %v1173
    %1635 = vmatprep.subr.bf16.mxu0 %v1178
    %1636 = vmatpush1.bf16.msra.mxu0 %v1177
    %1637 = vmatprep.subr.bf16.mxu0 %v1182
    %1638 = vmatpush1.bf16.msra.mxu0 %v1181
    %1639 = vmatprep.subr.bf16.mxu0 %v1186
    %1640 = vmatpush1.bf16.msra.mxu0 %v1185
    %1641 = vmatprep.subr.bf16.mxu0 %v1190
    %1642 = vmatpush1.bf16.msra.mxu0 %v1189
    %1643 = vmatprep.mubr.bf16.mxu0 %v478
    %1644 = vmatmul.mubr.bf16.gmra.mrb[0].mxu0 %v477
    %v1645 = vpop.f32.mrb[0].mxu0
    %v1646 = vadd.f32 %v1605, %v1645
    %v1647 = vpop.f32.mrb[0].mxu0
    %v1648 = vadd.f32 %v1607, %v1647
    %v1649 = vpop.f32.mrb[0].mxu0
    %v1650 = vpop.f32.mrb[0].mxu0
    %1651 = vdwg.mxu0
    %1652 = vmatprep.subr.bf16.mxu0 %v1194
    %1653 = vmatpush1.bf16.msra.mxu0 %v1193
    %1654 = vmatprep.subr.bf16.mxu0 %v1198
    %1655 = vmatpush1.bf16.msra.mxu0 %v1197
    %1656 = vmatprep.subr.bf16.mxu0 %v1202
    %1657 = vmatpush1.bf16.msra.mxu0 %v1201
    %1658 = vmatprep.subr.bf16.mxu0 %v1206
    %1659 = vmatpush1.bf16.msra.mxu0 %v1205
    %1660 = vmatprep.subr.bf16.mxu0 %v1210
    %1661 = vmatpush1.bf16.msra.mxu0 %v1209
    %1662 = vmatprep.subr.bf16.mxu0 %v1214
    %1663 = vmatpush1.bf16.msra.mxu0 %v1213
    %1664 = vmatprep.subr.bf16.mxu0 %v1218
    %1665 = vmatpush1.bf16.msra.mxu0 %v1217
    %1666 = vmatprep.subr.bf16.mxu0 %v1222
    %1667 = vmatpush1.bf16.msra.mxu0 %v1221
    %1668 = vmatprep.subr.bf16.mxu0 %v1226
    %1669 = vmatpush1.bf16.msra.mxu0 %v1225
    %1670 = vmatprep.subr.bf16.mxu0 %v1230
    %1671 = vmatpush1.bf16.msra.mxu0 %v1229
    %1672 = vmatprep.subr.bf16.mxu0 %v1234
    %1673 = vmatpush1.bf16.msra.mxu0 %v1233
    %1674 = vmatprep.subr.bf16.mxu0 %v1238
    %1675 = vmatpush1.bf16.msra.mxu0 %v1237
    %1676 = vmatprep.subr.bf16.mxu0 %v1242
    %1677 = vmatpush1.bf16.msra.mxu0 %v1241
    %1678 = vmatprep.subr.bf16.mxu0 %v1246
    %1679 = vmatpush1.bf16.msra.mxu0 %v1245
    %1680 = vmatprep.subr.bf16.mxu0 %v1250
    %1681 = vmatpush1.bf16.msra.mxu0 %v1249
    %1682 = vmatprep.subr.bf16.mxu0 %v1254
    %1683 = vmatpush1.bf16.msra.mxu0 %v1253
    %1684 = vmatprep.mubr.bf16.mxu0 %v480
    %1685 = vmatmul.mubr.bf16.gmra.mrb[0].mxu0 %v479
    %v1686 = vpop.f32.mrb[0].mxu0
    %v1687 = vadd.f32 %v1646, %v1686
    %v1688 = vpop.f32.mrb[0].mxu0
    %v1689 = vadd.f32 %v1648, %v1688
    %v1690 = vpop.f32.mrb[0].mxu0
    %v1691 = vpop.f32.mrb[0].mxu0
    %1692 = vdwg.mxu0
    %v1693 = vmax.f32 %v1564, 0.0
    %v1694 = vmax.f32 %v1566, 0.0
    %v1695 = vmax.f32 %v1687, 0.0
    %v1696 = vmax.f32 %v1689, 0.0
    %v1697 = vpack.c.bf16 %v1693, %v1693
    %v1698 = vpack.c.bf16 %v1694, %v1694
    %v1699 = vpack.c.bf16 %v1695, %v1695
    %v1700 = vpack.c.bf16 %v1696, %v1696
    %v1701 = vld [vmem:[#allocation10] sm:$0xff]
    %v1702 = vld [vmem:[#allocation10 + $0x8] sm:$0xff]
    %v1703 = vld [vmem:[#allocation10 + $0x10] sm:$0xff]
    %v1704 = vld [vmem:[#allocation10 + $0x18] sm:$0xff]
    %v1705 = vld [vmem:[#allocation10 + $0x20] sm:$0xff]
    %v1706 = vld [vmem:[#allocation10 + $0x28] sm:$0xff]
    %v1707 = vld [vmem:[#allocation10 + $0x30] sm:$0xff]
    %v1708 = vld [vmem:[#allocation10 + $0x38] sm:$0xff]
    %v1709 = vld [vmem:[#allocation10 + $0x40] sm:$0xff]
    %v1710 = vld [vmem:[#allocation10 + $0x48] sm:$0xff]
    %v1711 = vld [vmem:[#allocation10 + $0x50] sm:$0xff]
    %v1712 = vld [vmem:[#allocation10 + $0x58] sm:$0xff]
    %v1713 = vld [vmem:[#allocation10 + $0x60] sm:$0xff]
    %v1714 = vld [vmem:[#allocation10 + $0x68] sm:$0xff]
    %v1715 = vld [vmem:[#allocation10 + $0x70] sm:$0xff]
    %v1716 = vld [vmem:[#allocation10 + $0x78] sm:$0xff]
    %v1717 = vld [vmem:[#allocation10 + $0x80] sm:$0xff]
    %v1718 = vld [vmem:[#allocation10 + $0x88] sm:$0xff]
    %v1719 = vld [vmem:[#allocation10 + $0x90] sm:$0xff]
    %v1720 = vld [vmem:[#allocation10 + $0x98] sm:$0xff]
    %v1721 = vld [vmem:[#allocation10 + $0xa0] sm:$0xff]
    %v1722 = vld [vmem:[#allocation10 + $0xa8] sm:$0xff]
    %v1723 = vld [vmem:[#allocation10 + $0xb0] sm:$0xff]
    %v1724 = vld [vmem:[#allocation10 + $0xb8] sm:$0xff]
    %v1725 = vld [vmem:[#allocation10 + $0xc0] sm:$0xff]
    %v1726 = vld [vmem:[#allocation10 + $0xc8] sm:$0xff]
    %v1727 = vld [vmem:[#allocation10 + $0xd0] sm:$0xff]
    %v1728 = vld [vmem:[#allocation10 + $0xd8] sm:$0xff]
    %v1729 = vld [vmem:[#allocation10 + $0xe0] sm:$0xff]
    %v1730 = vld [vmem:[#allocation10 + $0xe8] sm:$0xff]
    %v1731 = vld [vmem:[#allocation10 + $0xf0] sm:$0xff]
    %v1732 = vld [vmem:[#allocation10 + $0xf8] sm:$0xff]
    %v1733 = vld [vmem:[#allocation10 + $0x100] sm:$0xff]
    %v1734 = vld [vmem:[#allocation10 + $0x108] sm:$0xff]
    %v1735 = vld [vmem:[#allocation10 + $0x110] sm:$0xff]
    %v1736 = vld [vmem:[#allocation10 + $0x118] sm:$0xff]
    %v1737 = vld [vmem:[#allocation10 + $0x120] sm:$0xff]
    %v1738 = vld [vmem:[#allocation10 + $0x128] sm:$0xff]
    %v1739 = vld [vmem:[#allocation10 + $0x130] sm:$0xff]
    %v1740 = vld [vmem:[#allocation10 + $0x138] sm:$0xff]
    %v1741 = vld [vmem:[#allocation10 + $0x140] sm:$0xff]
    %v1742 = vld [vmem:[#allocation10 + $0x148] sm:$0xff]
    %v1743 = vld [vmem:[#allocation10 + $0x150] sm:$0xff]
    %v1744 = vld [vmem:[#allocation10 + $0x158] sm:$0xff]
    %v1745 = vld [vmem:[#allocation10 + $0x160] sm:$0xff]
    %v1746 = vld [vmem:[#allocation10 + $0x168] sm:$0xff]
    %v1747 = vld [vmem:[#allocation10 + $0x170] sm:$0xff]
    %v1748 = vld [vmem:[#allocation10 + $0x178] sm:$0xff]
    %v1749 = vld [vmem:[#allocation10 + $0x180] sm:$0xff]
    %v1750 = vld [vmem:[#allocation10 + $0x188] sm:$0xff]
    %v1751 = vld [vmem:[#allocation10 + $0x190] sm:$0xff]
    %v1752 = vld [vmem:[#allocation10 + $0x198] sm:$0xff]
    %v1753 = vld [vmem:[#allocation10 + $0x1a0] sm:$0xff]
    %v1754 = vld [vmem:[#allocation10 + $0x1a8] sm:$0xff]
    %v1755 = vld [vmem:[#allocation10 + $0x1b0] sm:$0xff]
    %v1756 = vld [vmem:[#allocation10 + $0x1b8] sm:$0xff]
    %v1757 = vld [vmem:[#allocation10 + $0x1c0] sm:$0xff]
    %v1758 = vld [vmem:[#allocation10 + $0x1c8] sm:$0xff]
    %v1759 = vld [vmem:[#allocation10 + $0x1d0] sm:$0xff]
    %v1760 = vld [vmem:[#allocation10 + $0x1d8] sm:$0xff]
    %v1761 = vld [vmem:[#allocation10 + $0x1e0] sm:$0xff]
    %v1762 = vld [vmem:[#allocation10 + $0x1e8] sm:$0xff]
    %v1763 = vld [vmem:[#allocation10 + $0x1f0] sm:$0xff]
    %v1764 = vld [vmem:[#allocation10 + $0x1f8] sm:$0xff]
    %v1765 = vld [vmem:[%s5] sm:$0x3]
    %v1767 = vlaneseq
    %v1768 = vshrl.u32 %v1767, 7
    %v1769 = vsub.s32 0, %v1768
    %v1770 = vrot.slane %v1765, %v1769
    %v1771 = vlaneseq
    %v1772 = vshrl.u32 %v1771, 7
    %v1773 = vsub.s32 1, %v1772
    %v1774 = vrot.slane %v1765, %v1773
    %v1841 = vunpack.c.l.b16 %v1701
    %v1842 = vunpack.c.h.b16 %v1701
    %v1843 = vunpack.c.l.b16 %v1702
    %v1844 = vunpack.c.h.b16 %v1702
    %v1845 = vunpack.c.l.b16 %v1703
    %v1846 = vunpack.c.h.b16 %v1703
    %v1847 = vunpack.c.l.b16 %v1704
    %v1848 = vunpack.c.h.b16 %v1704
    %v1849 = vunpack.c.l.b16 %v1705
    %v1850 = vunpack.c.h.b16 %v1705
    %v1851 = vunpack.c.l.b16 %v1706
    %v1852 = vunpack.c.h.b16 %v1706
    %v1853 = vunpack.c.l.b16 %v1707
    %v1854 = vunpack.c.h.b16 %v1707
    %v1855 = vunpack.c.l.b16 %v1708
    %v1856 = vunpack.c.h.b16 %v1708
    %v1857 = vunpack.c.l.b16 %v1709
    %v1858 = vunpack.c.h.b16 %v1709
    %v1859 = vunpack.c.l.b16 %v1710
    %v1860 = vunpack.c.h.b16 %v1710
    %v1861 = vunpack.c.l.b16 %v1711
    %v1862 = vunpack.c.h.b16 %v1711
    %v1863 = vunpack.c.l.b16 %v1712
    %v1864 = vunpack.c.h.b16 %v1712
    %v1865 = vunpack.c.l.b16 %v1713
    %v1866 = vunpack.c.h.b16 %v1713
    %v1867 = vunpack.c.l.b16 %v1714
    %v1868 = vunpack.c.h.b16 %v1714
    %v1869 = vunpack.c.l.b16 %v1715
    %v1870 = vunpack.c.h.b16 %v1715
    %v1871 = vunpack.c.l.b16 %v1716
    %v1872 = vunpack.c.h.b16 %v1716
    %v1873 = vunpack.c.l.b16 %v1717
    %v1874 = vunpack.c.h.b16 %v1717
    %v1875 = vunpack.c.l.b16 %v1718
    %v1876 = vunpack.c.h.b16 %v1718
    %v1877 = vunpack.c.l.b16 %v1719
    %v1878 = vunpack.c.h.b16 %v1719
    %v1879 = vunpack.c.l.b16 %v1720
    %v1880 = vunpack.c.h.b16 %v1720
    %v1881 = vunpack.c.l.b16 %v1721
    %v1882 = vunpack.c.h.b16 %v1721
    %v1883 = vunpack.c.l.b16 %v1722
    %v1884 = vunpack.c.h.b16 %v1722
    %v1885 = vunpack.c.l.b16 %v1723
    %v1886 = vunpack.c.h.b16 %v1723
    %v1887 = vunpack.c.l.b16 %v1724
    %v1888 = vunpack.c.h.b16 %v1724
    %v1889 = vunpack.c.l.b16 %v1725
    %v1890 = vunpack.c.h.b16 %v1725
    %v1891 = vunpack.c.l.b16 %v1726
    %v1892 = vunpack.c.h.b16 %v1726
    %v1893 = vunpack.c.l.b16 %v1727
    %v1894 = vunpack.c.h.b16 %v1727
    %v1895 = vunpack.c.l.b16 %v1728
    %v1896 = vunpack.c.h.b16 %v1728
    %v1897 = vunpack.c.l.b16 %v1729
    %v1898 = vunpack.c.h.b16 %v1729
    %v1899 = vunpack.c.l.b16 %v1730
    %v1900 = vunpack.c.h.b16 %v1730
    %v1901 = vunpack.c.l.b16 %v1731
    %v1902 = vunpack.c.h.b16 %v1731
    %v1903 = vunpack.c.l.b16 %v1732
    %v1904 = vunpack.c.h.b16 %v1732
    %v1905 = vunpack.c.l.b16 %v1733
    %v1906 = vunpack.c.h.b16 %v1733
    %v1907 = vunpack.c.l.b16 %v1734
    %v1908 = vunpack.c.h.b16 %v1734
    %v1909 = vunpack.c.l.b16 %v1735
    %v1910 = vunpack.c.h.b16 %v1735
    %v1911 = vunpack.c.l.b16 %v1736
    %v1912 = vunpack.c.h.b16 %v1736
    %v1913 = vunpack.c.l.b16 %v1737
    %v1914 = vunpack.c.h.b16 %v1737
    %v1915 = vunpack.c.l.b16 %v1738
    %v1916 = vunpack.c.h.b16 %v1738
    %v1917 = vunpack.c.l.b16 %v1739
    %v1918 = vunpack.c.h.b16 %v1739
    %v1919 = vunpack.c.l.b16 %v1740
    %v1920 = vunpack.c.h.b16 %v1740
    %v1921 = vunpack.c.l.b16 %v1741
    %v1922 = vunpack.c.h.b16 %v1741
    %v1923 = vunpack.c.l.b16 %v1742
    %v1924 = vunpack.c.h.b16 %v1742
    %v1925 = vunpack.c.l.b16 %v1743
    %v1926 = vunpack.c.h.b16 %v1743
    %v1927 = vunpack.c.l.b16 %v1744
    %v1928 = vunpack.c.h.b16 %v1744
    %v1929 = vunpack.c.l.b16 %v1745
    %v1930 = vunpack.c.h.b16 %v1745
    %v1931 = vunpack.c.l.b16 %v1746
    %v1932 = vunpack.c.h.b16 %v1746
    %v1933 = vunpack.c.l.b16 %v1747
    %v1934 = vunpack.c.h.b16 %v1747
    %v1935 = vunpack.c.l.b16 %v1748
    %v1936 = vunpack.c.h.b16 %v1748
    %v1937 = vunpack.c.l.b16 %v1749
    %v1938 = vunpack.c.h.b16 %v1749
    %v1939 = vunpack.c.l.b16 %v1750
    %v1940 = vunpack.c.h.b16 %v1750
    %v1941 = vunpack.c.l.b16 %v1751
    %v1942 = vunpack.c.h.b16 %v1751
    %v1943 = vunpack.c.l.b16 %v1752
    %v1944 = vunpack.c.h.b16 %v1752
    %v1945 = vunpack.c.l.b16 %v1753
    %v1946 = vunpack.c.h.b16 %v1753
    %v1947 = vunpack.c.l.b16 %v1754
    %v1948 = vunpack.c.h.b16 %v1754
    %v1949 = vunpack.c.l.b16 %v1755
    %v1950 = vunpack.c.h.b16 %v1755
    %v1951 = vunpack.c.l.b16 %v1756
    %v1952 = vunpack.c.h.b16 %v1756
    %v1953 = vunpack.c.l.b16 %v1757
    %v1954 = vunpack.c.h.b16 %v1757
    %v1955 = vunpack.c.l.b16 %v1758
    %v1956 = vunpack.c.h.b16 %v1758
    %v1957 = vunpack.c.l.b16 %v1759
    %v1958 = vunpack.c.h.b16 %v1759
    %v1959 = vunpack.c.l.b16 %v1760
    %v1960 = vunpack.c.h.b16 %v1760
    %v1961 = vunpack.c.l.b16 %v1761
    %v1962 = vunpack.c.h.b16 %v1761
    %v1963 = vunpack.c.l.b16 %v1762
    %v1964 = vunpack.c.h.b16 %v1762
    %v1965 = vunpack.c.l.b16 %v1763
    %v1966 = vunpack.c.h.b16 %v1763
    %v1967 = vunpack.c.l.b16 %v1764
    %v1968 = vunpack.c.h.b16 %v1764
    %v1969 = vpack.c.b16 %v1843, %v1841
    %v1970 = vpack.c.b16 %v1844, %v1842
    %v1971 = vpack.c.b16 %v1847, %v1845
    %v1972 = vpack.c.b16 %v1848, %v1846
    %v1973 = vpack.c.b16 %v1851, %v1849
    %v1974 = vpack.c.b16 %v1852, %v1850
    %v1975 = vpack.c.b16 %v1855, %v1853
    %v1976 = vpack.c.b16 %v1856, %v1854
    %v1977 = vpack.c.b16 %v1859, %v1857
    %v1978 = vpack.c.b16 %v1860, %v1858
    %v1979 = vpack.c.b16 %v1863, %v1861
    %v1980 = vpack.c.b16 %v1864, %v1862
    %v1981 = vpack.c.b16 %v1867, %v1865
    %v1982 = vpack.c.b16 %v1868, %v1866
    %v1983 = vpack.c.b16 %v1871, %v1869
    %v1984 = vpack.c.b16 %v1872, %v1870
    %v1985 = vpack.c.b16 %v1875, %v1873
    %v1986 = vpack.c.b16 %v1876, %v1874
    %v1987 = vpack.c.b16 %v1879, %v1877
    %v1988 = vpack.c.b16 %v1880, %v1878
    %v1989 = vpack.c.b16 %v1883, %v1881
    %v1990 = vpack.c.b16 %v1884, %v1882
    %v1991 = vpack.c.b16 %v1887, %v1885
    %v1992 = vpack.c.b16 %v1888, %v1886
    %v1993 = vpack.c.b16 %v1891, %v1889
    %v1994 = vpack.c.b16 %v1892, %v1890
    %v1995 = vpack.c.b16 %v1895, %v1893
    %v1996 = vpack.c.b16 %v1896, %v1894
    %v1997 = vpack.c.b16 %v1899, %v1897
    %v1998 = vpack.c.b16 %v1900, %v1898
    %v1999 = vpack.c.b16 %v1903, %v1901
    %v2000 = vpack.c.b16 %v1904, %v1902
    %v2001 = vpack.c.b16 %v1907, %v1905
    %v2002 = vpack.c.b16 %v1908, %v1906
    %v2003 = vpack.c.b16 %v1911, %v1909
    %v2004 = vpack.c.b16 %v1912, %v1910
    %v2005 = vpack.c.b16 %v1915, %v1913
    %v2006 = vpack.c.b16 %v1916, %v1914
    %v2007 = vpack.c.b16 %v1919, %v1917
    %v2008 = vpack.c.b16 %v1920, %v1918
    %v2009 = vpack.c.b16 %v1923, %v1921
    %v2010 = vpack.c.b16 %v1924, %v1922
    %v2011 = vpack.c.b16 %v1927, %v1925
    %v2012 = vpack.c.b16 %v1928, %v1926
    %v2013 = vpack.c.b16 %v1931, %v1929
    %v2014 = vpack.c.b16 %v1932, %v1930
    %v2015 = vpack.c.b16 %v1935, %v1933
    %v2016 = vpack.c.b16 %v1936, %v1934
    %v2017 = vpack.c.b16 %v1939, %v1937
    %v2018 = vpack.c.b16 %v1940, %v1938
    %v2019 = vpack.c.b16 %v1943, %v1941
    %v2020 = vpack.c.b16 %v1944, %v1942
    %v2021 = vpack.c.b16 %v1947, %v1945
    %v2022 = vpack.c.b16 %v1948, %v1946
    %v2023 = vpack.c.b16 %v1951, %v1949
    %v2024 = vpack.c.b16 %v1952, %v1950
    %v2025 = vpack.c.b16 %v1955, %v1953
    %v2026 = vpack.c.b16 %v1956, %v1954
    %v2027 = vpack.c.b16 %v1959, %v1957
    %v2028 = vpack.c.b16 %v1960, %v1958
    %v2029 = vpack.c.b16 %v1963, %v1961
    %v2030 = vpack.c.b16 %v1964, %v1962
    %v2031 = vpack.c.b16 %v1967, %v1965
    %v2032 = vpack.c.b16 %v1968, %v1966
    %2097 = vmatprep.subr.bf16.mxu0 %v1970
    %2098 = vmatpush1.bf16.msra.mxu0 %v1969
    %2099 = vmatprep.subr.bf16.mxu0 %v1972
    %2100 = vmatpush1.bf16.msra.mxu0 %v1971
    %2101 = vmatprep.subr.bf16.mxu0 %v1974
    %2102 = vmatpush1.bf16.msra.mxu0 %v1973
    %2103 = vmatprep.subr.bf16.mxu0 %v1976
    %2104 = vmatpush1.bf16.msra.mxu0 %v1975
    %2105 = vmatprep.subr.bf16.mxu0 %v1978
    %2106 = vmatpush1.bf16.msra.mxu0 %v1977
    %2107 = vmatprep.subr.bf16.mxu0 %v1980
    %2108 = vmatpush1.bf16.msra.mxu0 %v1979
    %2109 = vmatprep.subr.bf16.mxu0 %v1982
    %2110 = vmatpush1.bf16.msra.mxu0 %v1981
    %2111 = vmatprep.subr.bf16.mxu0 %v1984
    %2112 = vmatpush1.bf16.msra.mxu0 %v1983
    %2113 = vmatprep.subr.bf16.mxu0 %v1986
    %2114 = vmatpush1.bf16.msra.mxu0 %v1985
    %2115 = vmatprep.subr.bf16.mxu0 %v1988
    %2116 = vmatpush1.bf16.msra.mxu0 %v1987
    %2117 = vmatprep.subr.bf16.mxu0 %v1990
    %2118 = vmatpush1.bf16.msra.mxu0 %v1989
    %2119 = vmatprep.subr.bf16.mxu0 %v1992
    %2120 = vmatpush1.bf16.msra.mxu0 %v1991
    %2121 = vmatprep.subr.bf16.mxu0 %v1994
    %2122 = vmatpush1.bf16.msra.mxu0 %v1993
    %2123 = vmatprep.subr.bf16.mxu0 %v1996
    %2124 = vmatpush1.bf16.msra.mxu0 %v1995
    %2125 = vmatprep.subr.bf16.mxu0 %v1998
    %2126 = vmatpush1.bf16.msra.mxu0 %v1997
    %2127 = vmatprep.subr.bf16.mxu0 %v2000
    %2128 = vmatpush1.bf16.msra.mxu0 %v1999
    %2129 = vmatprep.mubr.bf16.mxu0 %v1698
    %2130 = vmatmul.mubr.bf16.gmra.mrb[0].mxu0 %v1697
    %v2131 = vpop.f32.mrb[0].mxu0
    %v2132 = vadd.f32 %v1770, %v2131
    %v2133 = vpop.f32.mrb[0].mxu0
    %v2134 = vadd.f32 %v1774, %v2133
    %v2135 = vpop.f32.mrb[0].mxu0
    %v2136 = vpop.f32.mrb[0].mxu0
    %2137 = vdwg.mxu0
    %2138 = vmatprep.subr.bf16.mxu0 %v2002
    %2139 = vmatpush1.bf16.msra.mxu0 %v2001
    %2140 = vmatprep.subr.bf16.mxu0 %v2004
    %2141 = vmatpush1.bf16.msra.mxu0 %v2003
    %2142 = vmatprep.subr.bf16.mxu0 %v2006
    %2143 = vmatpush1.bf16.msra.mxu0 %v2005
    %2144 = vmatprep.subr.bf16.mxu0 %v2008
    %2145 = vmatpush1.bf16.msra.mxu0 %v2007
    %2146 = vmatprep.subr.bf16.mxu0 %v2010
    %2147 = vmatpush1.bf16.msra.mxu0 %v2009
    %2148 = vmatprep.subr.bf16.mxu0 %v2012
    %2149 = vmatpush1.bf16.msra.mxu0 %v2011
    %2150 = vmatprep.subr.bf16.mxu0 %v2014
    %2151 = vmatpush1.bf16.msra.mxu0 %v2013
    %2152 = vmatprep.subr.bf16.mxu0 %v2016
    %2153 = vmatpush1.bf16.msra.mxu0 %v2015
    %2154 = vmatprep.subr.bf16.mxu0 %v2018
    %2155 = vmatpush1.bf16.msra.mxu0 %v2017
    %2156 = vmatprep.subr.bf16.mxu0 %v2020
    %2157 = vmatpush1.bf16.msra.mxu0 %v2019
    %2158 = vmatprep.subr.bf16.mxu0 %v2022
    %2159 = vmatpush1.bf16.msra.mxu0 %v2021
    %2160 = vmatprep.subr.bf16.mxu0 %v2024
    %2161 = vmatpush1.bf16.msra.mxu0 %v2023
    %2162 = vmatprep.subr.bf16.mxu0 %v2026
    %2163 = vmatpush1.bf16.msra.mxu0 %v2025
    %2164 = vmatprep.subr.bf16.mxu0 %v2028
    %2165 = vmatpush1.bf16.msra.mxu0 %v2027
    %2166 = vmatprep.subr.bf16.mxu0 %v2030
    %2167 = vmatpush1.bf16.msra.mxu0 %v2029
    %2168 = vmatprep.subr.bf16.mxu0 %v2032
    %2169 = vmatpush1.bf16.msra.mxu0 %v2031
    %2170 = vmatprep.mubr.bf16.mxu0 %v1700
    %2171 = vmatmul.mubr.bf16.gmra.mrb[0].mxu0 %v1699
    %v2172 = vpop.f32.mrb[0].mxu0
    %v2173 = vadd.f32 %v2132, %v2172
    %v2174 = vpop.f32.mrb[0].mxu0
    %v2175 = vadd.f32 %v2134, %v2174
    %v2176 = vpop.f32.mrb[0].mxu0
    %v2177 = vpop.f32.mrb[0].mxu0
    %2178 = vdwg.mxu0
    %v2179 = vmax.f32 %v2173, 0.0
    %v2180 = vmax.f32 %v2175, 0.0
    %v2181 = vpack.c.bf16 %v2179, %v2179
    %v2182 = vpack.c.bf16 %v2180, %v2180
    %v2183 = vld [vmem:[#allocation11] sm:$0xf]
    %v2184 = vld [vmem:[#allocation11 + $0x4] sm:$0xf]
    %v2185 = vld [vmem:[#allocation11 + $0x8] sm:$0xf]
    %v2186 = vld [vmem:[#allocation11 + $0xc] sm:$0xf]
    %v2187 = vld [vmem:[#allocation11 + $0x10] sm:$0xf]
    %v2188 = vld [vmem:[#allocation11 + $0x14] sm:$0xf]
    %v2189 = vld [vmem:[#allocation11 + $0x18] sm:$0xf]
    %v2190 = vld [vmem:[#allocation11 + $0x1c] sm:$0xf]
    %v2191 = vld [vmem:[#allocation11 + $0x20] sm:$0xf]
    %v2192 = vld [vmem:[#allocation11 + $0x24] sm:$0xf]
    %v2193 = vld [vmem:[#allocation11 + $0x28] sm:$0xf]
    %v2194 = vld [vmem:[#allocation11 + $0x2c] sm:$0xf]
    %v2195 = vld [vmem:[#allocation11 + $0x30] sm:$0xf]
    %v2196 = vld [vmem:[#allocation11 + $0x34] sm:$0xf]
    %v2197 = vld [vmem:[#allocation11 + $0x38] sm:$0xf]
    %v2198 = vld [vmem:[#allocation11 + $0x3c] sm:$0xf]
    %v2199 = vld [vmem:[#allocation11 + $0x40] sm:$0xf]
    %v2200 = vld [vmem:[#allocation11 + $0x44] sm:$0xf]
    %v2201 = vld [vmem:[#allocation11 + $0x48] sm:$0xf]
    %v2202 = vld [vmem:[#allocation11 + $0x4c] sm:$0xf]
    %v2203 = vld [vmem:[#allocation11 + $0x50] sm:$0xf]
    %v2204 = vld [vmem:[#allocation11 + $0x54] sm:$0xf]
    %v2205 = vld [vmem:[#allocation11 + $0x58] sm:$0xf]
    %v2206 = vld [vmem:[#allocation11 + $0x5c] sm:$0xf]
    %v2207 = vld [vmem:[#allocation11 + $0x60] sm:$0xf]
    %v2208 = vld [vmem:[#allocation11 + $0x64] sm:$0xf]
    %v2209 = vld [vmem:[#allocation11 + $0x68] sm:$0xf]
    %v2210 = vld [vmem:[#allocation11 + $0x6c] sm:$0xf]
    %v2211 = vld [vmem:[#allocation11 + $0x70] sm:$0xf]
    %v2212 = vld [vmem:[#allocation11 + $0x74] sm:$0xf]
    %v2213 = vld [vmem:[#allocation11 + $0x78] sm:$0xf]
    %v2214 = vld [vmem:[#allocation11 + $0x7c] sm:$0xf]
    %v2215 = vld [vmem:[%s7] sm:$0x1]
    %v2217 = vlaneseq
    %v2218 = vshrl.u32 %v2217, 7
    %v2219 = vsub.s32 0, %v2218
    %v2220 = vrot.slane %v2215, %v2219
    %v2254 = vunpack.c.l.b16 %v2183
    %v2255 = vunpack.c.l.b16 %v2184
    %v2256 = vunpack.c.l.b16 %v2185
    %v2257 = vunpack.c.l.b16 %v2186
    %v2258 = vunpack.c.l.b16 %v2187
    %v2259 = vunpack.c.l.b16 %v2188
    %v2260 = vunpack.c.l.b16 %v2189
    %v2261 = vunpack.c.l.b16 %v2190
    %v2262 = vunpack.c.l.b16 %v2191
    %v2263 = vunpack.c.l.b16 %v2192
    %v2264 = vunpack.c.l.b16 %v2193
    %v2265 = vunpack.c.l.b16 %v2194
    %v2266 = vunpack.c.l.b16 %v2195
    %v2267 = vunpack.c.l.b16 %v2196
    %v2268 = vunpack.c.l.b16 %v2197
    %v2269 = vunpack.c.l.b16 %v2198
    %v2270 = vunpack.c.l.b16 %v2199
    %v2271 = vunpack.c.l.b16 %v2200
    %v2272 = vunpack.c.l.b16 %v2201
    %v2273 = vunpack.c.l.b16 %v2202
    %v2274 = vunpack.c.l.b16 %v2203
    %v2275 = vunpack.c.l.b16 %v2204
    %v2276 = vunpack.c.l.b16 %v2205
    %v2277 = vunpack.c.l.b16 %v2206
    %v2278 = vunpack.c.l.b16 %v2207
    %v2279 = vunpack.c.l.b16 %v2208
    %v2280 = vunpack.c.l.b16 %v2209
    %v2281 = vunpack.c.l.b16 %v2210
    %v2282 = vunpack.c.l.b16 %v2211
    %v2283 = vunpack.c.l.b16 %v2212
    %v2284 = vunpack.c.l.b16 %v2213
    %v2285 = vunpack.c.l.b16 %v2214
    %v2286 = vpack.c.b16 %v2255, %v2254
    %v2287 = vpack.c.b16 %v2257, %v2256
    %v2288 = vpack.c.b16 %v2259, %v2258
    %v2289 = vpack.c.b16 %v2261, %v2260
    %v2290 = vpack.c.b16 %v2263, %v2262
    %v2291 = vpack.c.b16 %v2265, %v2264
    %v2292 = vpack.c.b16 %v2267, %v2266
    %v2293 = vpack.c.b16 %v2269, %v2268
    %v2294 = vpack.c.b16 %v2271, %v2270
    %v2295 = vpack.c.b16 %v2273, %v2272
    %v2296 = vpack.c.b16 %v2275, %v2274
    %v2297 = vpack.c.b16 %v2277, %v2276
    %v2298 = vpack.c.b16 %v2279, %v2278
    %v2299 = vpack.c.b16 %v2281, %v2280
    %v2300 = vpack.c.b16 %v2283, %v2282
    %v2301 = vpack.c.b16 %v2285, %v2284
    %2318 = vmatprep.subr.bf16.mxu0 0
    %2319 = vmatpush1.bf16.msra.mxu0 %v2286
    %2320 = vmatprep.subr.bf16.mxu0 0
    %2321 = vmatpush1.bf16.msra.mxu0 %v2287
    %2322 = vmatprep.subr.bf16.mxu0 0
    %2323 = vmatpush1.bf16.msra.mxu0 %v2288
    %2324 = vmatprep.subr.bf16.mxu0 0
    %2325 = vmatpush1.bf16.msra.mxu0 %v2289
    %2326 = vmatprep.subr.bf16.mxu0 0
    %2327 = vmatpush1.bf16.msra.mxu0 %v2290
    %2328 = vmatprep.subr.bf16.mxu0 0
    %2329 = vmatpush1.bf16.msra.mxu0 %v2291
    %2330 = vmatprep.subr.bf16.mxu0 0
    %2331 = vmatpush1.bf16.msra.mxu0 %v2292
    %2332 = vmatprep.subr.bf16.mxu0 0
    %2333 = vmatpush1.bf16.msra.mxu0 %v2293
    %2334 = vmatprep.subr.bf16.mxu0 0
    %2335 = vmatpush1.bf16.msra.mxu0 %v2294
    %2336 = vmatprep.subr.bf16.mxu0 0
    %2337 = vmatpush1.bf16.msra.mxu0 %v2295
    %2338 = vmatprep.subr.bf16.mxu0 0
    %2339 = vmatpush1.bf16.msra.mxu0 %v2296
    %2340 = vmatprep.subr.bf16.mxu0 0
    %2341 = vmatpush1.bf16.msra.mxu0 %v2297
    %2342 = vmatprep.subr.bf16.mxu0 0
    %2343 = vmatpush1.bf16.msra.mxu0 %v2298
    %2344 = vmatprep.subr.bf16.mxu0 0
    %2345 = vmatpush1.bf16.msra.mxu0 %v2299
    %2346 = vmatprep.subr.bf16.mxu0 0
    %2347 = vmatpush1.bf16.msra.mxu0 %v2300
    %2348 = vmatprep.subr.bf16.mxu0 0
    %2349 = vmatpush1.bf16.msra.mxu0 %v2301
    %2350 = vmatprep.mubr.bf16.mxu0 %v2182
    %2351 = vmatmul.mubr.bf16.gmra.mrb[0].mxu0 %v2181
    %v2352 = vpop.f32.mrb[0].mxu0
    %v2353 = vadd.f32 %v2220, %v2352
    %v2354 = vpop.f32.mrb[0].mxu0
    %v2355 = vpop.f32.mrb[0].mxu0
    %v2356 = vpop.f32.mrb[0].mxu0
    %2357 = vdwg.mxu0
    %2358 = vst [vmem:[#allocation13] sm:$0xff] %v2353
    // Predicated region
    $region58: #{tpu_custom_call.1} parent=1 // pred_check
      _
    $region59: #{tpu_custom_call.1} parent=1 // pred_check_branch
      %2360 = sbr.rel (0) target = $region61
    $region60: #{tpu_custom_call.1} parent=1 // pred_region
      %s2362 = ssub.s32 128, 128
      %2363 = vsyncadd [#allocation4], %s2362
      %s2365 = sshll.u32 [#allocation13], 4
      %s2366 = int_to_ptr.vmem [resolvable:$true] %s2365
      %2368 = dma.vmem_to_hbm [thread:$0]  %s2366, 128, %s8, [#allocation4]
    $region61: #{tpu_custom_call.1} parent=1 // pred_fallthru
      _
    // Predicated region
    $region62: #{tpu_custom_call.1} parent=1 // pred_check
      _
    $region63: #{tpu_custom_call.1} parent=1 // pred_check_branch
      %2370 = sbr.rel (0) target = $region65
    $region64: #{tpu_custom_call.1} parent=1 // pred_region
      %2371 = dma.done [#allocation4], 128
    $region65: #{tpu_custom_call.1} parent=1 // pred_fallthru
      _
    %2372 = vsyncpa [#allocation3], 1
    %2373 = vsyncpa [#allocation6], 1
    %2374 = vsyncpa [#allocation9], 1
    %2375 = vsyncpa [#allocation12], 1
    %2376 = vsyncpa [#allocation4], 1

</llo_original>
